<compile_context>
chip_gen: v5e
topology: v5e:2x2
jax: 0.10.0
libtpu: 0.0.40
codegen_flags: <defaults>
</compile_context>

<pallas_src>
import functools

import jax
import jax.numpy as jnp
from jax.experimental import pallas as pl
from jax.experimental.pallas import tpu as pltpu


def _spatial_attention_kernel(x_ref, s_ref, o_ref, feat_s, *, C, H, W, K, pad):
    """One batch element per grid step.

    x_ref  : (1, C, H, W)   raw input tile (VMEM)
    s_ref  : (K, 2W, W)     banded conv weights (rows [0,W)=avg ch, [W,2W)=max ch)
    o_ref  : (1, 1, H, W)   sigmoid(conv) output tile
    feat_s : (H+2*pad, 2W)  VMEM scratch holding the H-zero-padded pooled maps
    """
    # ---- channel pooling (mean + max), fully unrolled over C ---------------
    x0 = x_ref[0, 0]
    acc_sum = x0
    acc_max = x0
    for c in range(1, C):
        xc = x_ref[0, c]
        acc_sum = acc_sum + xc
        acc_max = jnp.maximum(acc_max, xc)
    avg = acc_sum * (1.0 / C)

    # ---- build H-padded [avg | max] feature slab in VMEM --------------------
    feat_s[...] = jnp.zeros_like(feat_s)                     # zero border rows
    feat_s[pl.ds(pad, H), :] = jnp.concatenate([avg, acc_max], axis=1)

    # ---- 7x7 conv: K sublane-shifted slabs x banded weight matrices (MXU) ---
    acc = jnp.zeros((H, W), jnp.float32)
    for di in range(K):
        slab = feat_s[pl.ds(di, H), :]                       # (H, 2W)
        acc = acc + jnp.dot(slab, s_ref[di],
                            preferred_element_type=jnp.float32,
                            precision=jax.lax.Precision.HIGHEST)

    # ---- sigmoid ------------------------------------------------------------
    o_ref[0, 0] = 1.0 / (1.0 + jnp.exp(-acc))


@functools.partial(jax.jit, static_argnames=("kernel_size",))
def spatial_attention_forward(x, w, *, kernel_size=7):
    """x: (B, C, H, W) NCHW; w: (1, 2, k, k) torch OIHW conv weight (no bias)."""
    assert kernel_size in (3, 7)
    pad = 3 if kernel_size == 7 else 1
    B, C, H, W = x.shape
    K = kernel_size
    Hp = H + 2 * pad

    x = x.astype(jnp.float32)
    w2 = w.astype(jnp.float32).reshape(2, K, K)              # (ch, kh, kw)

    # Banded weight matrices folding the W-direction zero padding:
    #   S[di, ch*W + c', j] = w[ch, di, c' - j + pad]  if 0 <= c'-j+pad < K else 0
    cp = jnp.arange(W)[:, None]
    j = jnp.arange(W)[None, :]
    dj = cp - j + pad                                         # (W, W)
    valid = (dj >= 0) & (dj < K)
    band = jnp.where(valid[None, None],
                     w2[:, :, jnp.clip(dj, 0, K - 1)], 0.0)   # (2, K, W, W)
    S = band.transpose(1, 0, 2, 3).reshape(K, 2 * W, W).astype(jnp.float32)

    kern = functools.partial(_spatial_attention_kernel,
                             C=C, H=H, W=W, K=K, pad=pad)
    out = pl.pallas_call(
        kern,
        out_shape=jax.ShapeDtypeStruct((B, 1, H, W), jnp.float32),
        grid=(B,),
        in_specs=[
            pl.BlockSpec((1, C, H, W), lambda b: (b, 0, 0, 0)),
            pl.BlockSpec((K, 2 * W, W), lambda b: (0, 0, 0)),
        ],
        out_specs=pl.BlockSpec((1, 1, H, W), lambda b: (b, 0, 0, 0)),
        scratch_shapes=[
            pltpu.VMEM((Hp, 2 * W), jnp.float32),
        ],
        compiler_params=pltpu.CompilerParams(
            dimension_semantics=("parallel",)),
    )(x, S)
    return out


def spatial_attention_ref(x, w, *, kernel_size=7):
    """Pure-JAX reference matching the PyTorch module."""
    pad = 3 if kernel_size == 7 else 1
    avg = jnp.mean(x, axis=1, keepdims=True)
    mx = jnp.max(x, axis=1, keepdims=True)
    feat = jnp.concatenate([avg, mx], axis=1)
    y = jax.lax.conv_general_dilated(
        feat, w, window_strides=(1, 1), padding=((pad, pad), (pad, pad)),
        dimension_numbers=("NCHW", "OIHW", "NCHW"),
        precision=jax.lax.Precision.HIGHEST)
    return jax.nn.sigmoid(y)


if __name__ == "__main__":
    key = jax.random.PRNGKey(0)
    kx, kw = jax.random.split(key)
    B, C, H, W = 2, 4, 16, 16
    x = jax.random.normal(kx, (B, C, H, W), jnp.float32)
    # Conv2d(2, 1, kernel_size=7, padding=3, bias=False) weight, torch OIHW layout.
    w = 0.1 * jax.random.normal(kw, (1, 2, 7, 7), jnp.float32)

    out = spatial_attention_forward(x, w, kernel_size=7)
    out = jax.block_until_ready(out)

    ref = spatial_attention_ref(x, w, kernel_size=7)
    assert out.shape == (B, 1, H, W)
    assert jnp.all(jnp.isfinite(out))
    assert jnp.allclose(out, ref, atol=2e-3, rtol=2e-3), float(
        jnp.max(jnp.abs(out - ref)))
    print("KERNEL_OK")
</pallas_src>

<mosaic_0001>
module attributes {stable_mosaic.version = 11 : i64} {
  func.func @_spatial_attention_kernel(%arg0: i32, %arg1: memref<1x4x16x16xf32, #tpu.memory_space<vmem>>, %arg2: memref<7x32x16xf32, #tpu.memory_space<vmem>>, %arg3: memref<1x1x16x16xf32, #tpu.memory_space<vmem>>, %arg4: memref<22x32xf32, #tpu.memory_space<vmem>>) attributes {dimension_semantics = [#tpu.dimension_semantics<parallel>], iteration_bounds = array<i64: 2>, scalar_prefetch = 0 : i64, scratch_operands = 1 : i64, tpu.core_type = #tpu.core_type<tc>, window_params = [{transform_indices = @transform_0, window_bounds = array<i64: 1, 4, 16, 16>}, {pipeline_mode = #tpu.pipeline_mode<synchronous>, transform_indices = @transform_1, window_bounds = array<i64: 7, 32, 16>}, {transform_indices = @transform_2, window_bounds = array<i64: 1, 1, 16, 16>}]} {
    %c0 = arith.constant 0 : index
    %c0_0 = arith.constant 0 : index
    %c0_1 = arith.constant 0 : index
    %c0_2 = arith.constant 0 : index
    %0 = vector.load %arg1[%c0, %c0_0, %c0_1, %c0_2] : memref<1x4x16x16xf32, #tpu.memory_space<vmem>>, vector<1x1x16x16xf32>
    %1 = vector.shape_cast %0 : vector<1x1x16x16xf32> to vector<16x16xf32>
    %c0_3 = arith.constant 0 : index
    %c1 = arith.constant 1 : index
    %c0_4 = arith.constant 0 : index
    %c0_5 = arith.constant 0 : index
    %2 = vector.load %arg1[%c0_3, %c1, %c0_4, %c0_5] : memref<1x4x16x16xf32, #tpu.memory_space<vmem>>, vector<1x1x16x16xf32>
    %3 = vector.shape_cast %2 : vector<1x1x16x16xf32> to vector<16x16xf32>
    %4 = arith.addf %1, %3 : vector<16x16xf32>
    %5 = arith.maximumf %1, %3 : vector<16x16xf32>
    %c0_6 = arith.constant 0 : index
    %c2 = arith.constant 2 : index
    %c0_7 = arith.constant 0 : index
    %c0_8 = arith.constant 0 : index
    %6 = vector.load %arg1[%c0_6, %c2, %c0_7, %c0_8] : memref<1x4x16x16xf32, #tpu.memory_space<vmem>>, vector<1x1x16x16xf32>
    %7 = vector.shape_cast %6 : vector<1x1x16x16xf32> to vector<16x16xf32>
    %8 = arith.addf %4, %7 : vector<16x16xf32>
    %9 = arith.maximumf %5, %7 : vector<16x16xf32>
    %c0_9 = arith.constant 0 : index
    %c3 = arith.constant 3 : index
    %c0_10 = arith.constant 0 : index
    %c0_11 = arith.constant 0 : index
    %10 = vector.load %arg1[%c0_9, %c3, %c0_10, %c0_11] : memref<1x4x16x16xf32, #tpu.memory_space<vmem>>, vector<1x1x16x16xf32>
    %11 = vector.shape_cast %10 : vector<1x1x16x16xf32> to vector<16x16xf32>
    %12 = arith.addf %8, %11 : vector<16x16xf32>
    %13 = arith.maximumf %9, %11 : vector<16x16xf32>
    %cst = arith.constant 2.500000e-01 : f32
    %14 = vector.broadcast %cst : f32 to vector<16x16xf32>
    %15 = arith.mulf %12, %14 : vector<16x16xf32>
    %cst_12 = arith.constant 0.000000e+00 : f32
    %16 = vector.broadcast %cst_12 : f32 to vector<22x32xf32>
    %c0_13 = arith.constant 0 : index
    %c0_14 = arith.constant 0 : index
    %17 = vector.load %arg4[%c0_13, %c0_14] : memref<22x32xf32, #tpu.memory_space<vmem>>, vector<22x32xf32>
    tpu.vector_store %arg4[%c0_13, %c0_14], %16 {strides = array<i32>} : memref<22x32xf32, #tpu.memory_space<vmem>>, vector<22x32xf32>,
    %18 = tpu.concatenate %15, %13 in 1 : vector<16x16xf32>, vector<16x16xf32> -> vector<16x32xf32>
    %c3_15 = arith.constant 3 : index
    %c0_16 = arith.constant 0 : index
    %19 = vector.load %arg4[%c3_15, %c0_16] : memref<22x32xf32, #tpu.memory_space<vmem>>, vector<16x32xf32>
    tpu.vector_store %arg4[%c3_15, %c0_16], %18 {strides = array<i32>} : memref<22x32xf32, #tpu.memory_space<vmem>>, vector<16x32xf32>,
    %cst_17 = arith.constant 0.000000e+00 : f32
    %20 = vector.broadcast %cst_17 : f32 to vector<16x16xf32>
    %c0_18 = arith.constant 0 : index
    %c0_19 = arith.constant 0 : index
    %21 = vector.load %arg4[%c0_18, %c0_19] : memref<22x32xf32, #tpu.memory_space<vmem>>, vector<16x32xf32>
    %c0_20 = arith.constant 0 : index
    %c0_21 = arith.constant 0 : index
    %c0_22 = arith.constant 0 : index
    %22 = vector.load %arg2[%c0_20, %c0_21, %c0_22] : memref<7x32x16xf32, #tpu.memory_space<vmem>>, vector<1x32x16xf32>
    %23 = vector.shape_cast %22 : vector<1x32x16xf32> to vector<32x16xf32>
    %cst_23 = arith.constant dense<0.000000e+00> : vector<16x16xf32>
    %24 = tpu.matmul %21, %23, %cst_23 {dimension_numbers = #tpu.dot_dimension_numbers<[1], [0], [0], [1], [0, 0, 1, 1], [], []>, precision = #tpu.contract_precision<fp32>} : vector<16x32xf32>, vector<32x16xf32>, vector<16x16xf32> -> vector<16x16xf32>
    %25 = arith.addf %20, %24 : vector<16x16xf32>
    %c1_24 = arith.constant 1 : index
    %c0_25 = arith.constant 0 : index
    %26 = vector.load %arg4[%c1_24, %c0_25] : memref<22x32xf32, #tpu.memory_space<vmem>>, vector<16x32xf32>
    %c1_26 = arith.constant 1 : index
    %c0_27 = arith.constant 0 : index
    %c0_28 = arith.constant 0 : index
    %27 = vector.load %arg2[%c1_26, %c0_27, %c0_28] : memref<7x32x16xf32, #tpu.memory_space<vmem>>, vector<1x32x16xf32>
    %28 = vector.shape_cast %27 : vector<1x32x16xf32> to vector<32x16xf32>
    %cst_29 = arith.constant dense<0.000000e+00> : vector<16x16xf32>
    %29 = tpu.matmul %26, %28, %cst_29 {dimension_numbers = #tpu.dot_dimension_numbers<[1], [0], [0], [1], [0, 0, 1, 1], [], []>, precision = #tpu.contract_precision<fp32>} : vector<16x32xf32>, vector<32x16xf32>, vector<16x16xf32> -> vector<16x16xf32>
    %30 = arith.addf %25, %29 : vector<16x16xf32>
    %c2_30 = arith.constant 2 : index
    %c0_31 = arith.constant 0 : index
    %31 = vector.load %arg4[%c2_30, %c0_31] : memref<22x32xf32, #tpu.memory_space<vmem>>, vector<16x32xf32>
    %c2_32 = arith.constant 2 : index
    %c0_33 = arith.constant 0 : index
    %c0_34 = arith.constant 0 : index
    %32 = vector.load %arg2[%c2_32, %c0_33, %c0_34] : memref<7x32x16xf32, #tpu.memory_space<vmem>>, vector<1x32x16xf32>
    %33 = vector.shape_cast %32 : vector<1x32x16xf32> to vector<32x16xf32>
    %cst_35 = arith.constant dense<0.000000e+00> : vector<16x16xf32>
    %34 = tpu.matmul %31, %33, %cst_35 {dimension_numbers = #tpu.dot_dimension_numbers<[1], [0], [0], [1], [0, 0, 1, 1], [], []>, precision = #tpu.contract_precision<fp32>} : vector<16x32xf32>, vector<32x16xf32>, vector<16x16xf32> -> vector<16x16xf32>
    %35 = arith.addf %30, %34 : vector<16x16xf32>
    %c3_36 = arith.constant 3 : index
    %c0_37 = arith.constant 0 : index
    %36 = vector.load %arg4[%c3_36, %c0_37] : memref<22x32xf32, #tpu.memory_space<vmem>>, vector<16x32xf32>
    %c3_38 = arith.constant 3 : index
    %c0_39 = arith.constant 0 : index
    %c0_40 = arith.constant 0 : index
    %37 = vector.load %arg2[%c3_38, %c0_39, %c0_40] : memref<7x32x16xf32, #tpu.memory_space<vmem>>, vector<1x32x16xf32>
    %38 = vector.shape_cast %37 : vector<1x32x16xf32> to vector<32x16xf32>
    %cst_41 = arith.constant dense<0.000000e+00> : vector<16x16xf32>
    %39 = tpu.matmul %36, %38, %cst_41 {dimension_numbers = #tpu.dot_dimension_numbers<[1], [0], [0], [1], [0, 0, 1, 1], [], []>, precision = #tpu.contract_precision<fp32>} : vector<16x32xf32>, vector<32x16xf32>, vector<16x16xf32> -> vector<16x16xf32>
    %40 = arith.addf %35, %39 : vector<16x16xf32>
    %c4 = arith.constant 4 : index
    %c0_42 = arith.constant 0 : index
    %41 = vector.load %arg4[%c4, %c0_42] : memref<22x32xf32, #tpu.memory_space<vmem>>, vector<16x32xf32>
    %c4_43 = arith.constant 4 : index
    %c0_44 = arith.constant 0 : index
    %c0_45 = arith.constant 0 : index
    %42 = vector.load %arg2[%c4_43, %c0_44, %c0_45] : memref<7x32x16xf32, #tpu.memory_space<vmem>>, vector<1x32x16xf32>
    %43 = vector.shape_cast %42 : vector<1x32x16xf32> to vector<32x16xf32>
    %cst_46 = arith.constant dense<0.000000e+00> : vector<16x16xf32>
    %44 = tpu.matmul %41, %43, %cst_46 {dimension_numbers = #tpu.dot_dimension_numbers<[1], [0], [0], [1], [0, 0, 1, 1], [], []>, precision = #tpu.contract_precision<fp32>} : vector<16x32xf32>, vector<32x16xf32>, vector<16x16xf32> -> vector<16x16xf32>
    %45 = arith.addf %40, %44 : vector<16x16xf32>
    %c5 = arith.constant 5 : index
    %c0_47 = arith.constant 0 : index
    %46 = vector.load %arg4[%c5, %c0_47] : memref<22x32xf32, #tpu.memory_space<vmem>>, vector<16x32xf32>
    %c5_48 = arith.constant 5 : index
    %c0_49 = arith.constant 0 : index
    %c0_50 = arith.constant 0 : index
    %47 = vector.load %arg2[%c5_48, %c0_49, %c0_50] : memref<7x32x16xf32, #tpu.memory_space<vmem>>, vector<1x32x16xf32>
    %48 = vector.shape_cast %47 : vector<1x32x16xf32> to vector<32x16xf32>
    %cst_51 = arith.constant dense<0.000000e+00> : vector<16x16xf32>
    %49 = tpu.matmul %46, %48, %cst_51 {dimension_numbers = #tpu.dot_dimension_numbers<[1], [0], [0], [1], [0, 0, 1, 1], [], []>, precision = #tpu.contract_precision<fp32>} : vector<16x32xf32>, vector<32x16xf32>, vector<16x16xf32> -> vector<16x16xf32>
    %50 = arith.addf %45, %49 : vector<16x16xf32>
    %c6 = arith.constant 6 : index
    %c0_52 = arith.constant 0 : index
    %51 = vector.load %arg4[%c6, %c0_52] : memref<22x32xf32, #tpu.memory_space<vmem>>, vector<16x32xf32>
    %c6_53 = arith.constant 6 : index
    %c0_54 = arith.constant 0 : index
    %c0_55 = arith.constant 0 : index
    %52 = vector.load %arg2[%c6_53, %c0_54, %c0_55] : memref<7x32x16xf32, #tpu.memory_space<vmem>>, vector<1x32x16xf32>
    %53 = vector.shape_cast %52 : vector<1x32x16xf32> to vector<32x16xf32>
    %cst_56 = arith.constant dense<0.000000e+00> : vector<16x16xf32>
    %54 = tpu.matmul %51, %53, %cst_56 {dimension_numbers = #tpu.dot_dimension_numbers<[1], [0], [0], [1], [0, 0, 1, 1], [], []>, precision = #tpu.contract_precision<fp32>} : vector<16x32xf32>, vector<32x16xf32>, vector<16x16xf32> -> vector<16x16xf32>
    %55 = arith.addf %50, %54 : vector<16x16xf32>
    %cst_57 = arith.constant 0.000000e+00 : f32
    %56 = vector.broadcast %cst_57 : f32 to vector<16x16xf32>
    %57 = arith.subf %56, %55 : vector<16x16xf32>
    %58 = math.exp %57 : vector<16x16xf32>
    %cst_58 = arith.constant 1.000000e+00 : f32
    %59 = vector.broadcast %cst_58 : f32 to vector<16x16xf32>
    %60 = arith.addf %59, %58 : vector<16x16xf32>
    %cst_59 = arith.constant 1.000000e+00 : f32
    %61 = vector.broadcast %cst_59 : f32 to vector<16x16xf32>
    %62 = arith.divf %61, %60 : vector<16x16xf32>
    %c0_60 = arith.constant 0 : index
    %c0_61 = arith.constant 0 : index
    %c0_62 = arith.constant 0 : index
    %c0_63 = arith.constant 0 : index
    %63 = vector.load %arg3[%c0_60, %c0_61, %c0_62, %c0_63] : memref<1x1x16x16xf32, #tpu.memory_space<vmem>>, vector<1x1x16x16xf32>
    %64 = vector.shape_cast %63 : vector<1x1x16x16xf32> to vector<16x16xf32>
    %65 = vector.shape_cast %62 : vector<16x16xf32> to vector<1x1x16x16xf32>
    tpu.vector_store %arg3[%c0_60, %c0_61, %c0_62, %c0_63], %65 {strides = array<i32>} : memref<1x1x16x16xf32, #tpu.memory_space<vmem>>, vector<1x1x16x16xf32>,
    return
  }
  func.func @transform_0(%arg0: i32) -> (i32, i32, i32, i32) {
    %c0_i32 = arith.constant 0 : i32
    %c0_i32_0 = arith.constant 0 : i32
    %c0_i32_1 = arith.constant 0 : i32
    %c0_i32_2 = arith.constant 0 : i32
    return %arg0, %c0_i32, %c0_i32_0, %c0_i32_1 : i32, i32, i32, i32
  }
  func.func @transform_1(%arg0: i32) -> (i32, i32, i32) {
    %c0_i32 = arith.constant 0 : i32
    %c0_i32_0 = arith.constant 0 : i32
    %c0_i32_1 = arith.constant 0 : i32
    %c0_i32_2 = arith.constant 0 : i32
    return %c0_i32, %c0_i32_0, %c0_i32_1 : i32, i32, i32
  }
  func.func @transform_2(%arg0: i32) -> (i32, i32, i32, i32) {
    %c0_i32 = arith.constant 0 : i32
    %c0_i32_0 = arith.constant 0 : i32
    %c0_i32_1 = arith.constant 0 : i32
    %c0_i32_2 = arith.constant 0 : i32
    return %arg0, %c0_i32, %c0_i32_0, %c0_i32_1 : i32, i32, i32, i32
  }
}

</mosaic_0001>

<llo_original>
// kernel: spatial_attention_forward.1
$region0: #{spatial_attention_forward.1}
  #allocation0 [shape = 'u32[]', space=smem, size = 0x4, offset = 0x4, fixed_abs, tag = 'smem constant byte address 0x4 - core index']
  #allocation1 [shape = 'u32[72,128]{1,0:T(1,128)}', space=vmem, size = 0x9000, scoped, tag = 'internal scratch']
  #allocation2 [shape = 'f32[22,32]{1,0:T(8,128)}', space=vmem, size = 0x3000, scoped, tag = 'scratch operand']
  %s0 = inlined_call_operand.vmem [shape: f32[2,4,16,16], index: 0, kind: input, shape index: {}]
  %s1 = inlined_call_operand.vmem [shape: f32[7,32,16], index: 1, kind: input, shape index: {}]
  %s2 = inlined_call_operand.hbm [shape: f32[2,1,16,16], index: 2, kind: output, shape index: {}]
  %s3 = sld [smem:[#allocation0]]
  $region41: #{spatial_attention_forward.1} parent=0
    _
  %s5 = ssub.s32 1, %s3
  %s6 = scalar_select 0, %s5, %s3
  $region1: #{spatial_attention_forward.1} parent=0
    #allocation3 [shape = 'u8[16384]{0}', space=vmem, size = 0x4000, scoped, tag = 'output window, operand 0']
    #allocation4 [shape = 's32[2]{0}', space=sflag, size = 0x8, scoped, tag = 'scoped memory for spatial_attention_forward.1']
    %7 = vsyncpa [#allocation4], 0
    %s8 = scalar_lea.sflag [#allocation4], 1
    %9 = vsyncpa %s8, 0
    loop: start=0, step=1, limit=4
    $region2: #{spatial_attention_forward.1} parent=1 // loop_pre_header
      _
    $region3: #{spatial_attention_forward.1} parent=1 // loop_header
      %s11 = sphi 0, %s15
      %p12 = scmp.ge.s32.totalorder %s11, 4
      %s21 = sphi 0, %s23
      %s24 = sphi 0, %s21
      %s25 = sphi 0, %s24
      %s41 = sphi 0, %s25
      %s45 = sphi 0, %s45
      %s47 = sphi 0, %s45
      %s48 = sphi 0, %s47
      %s62 = sphi 0, %s48
      %s68 = sphi 0, %s70
      %s71 = sphi 0, %s68
      %s72 = sphi 0, %s71
      %s88 = sphi 0, %s72
    $region4: #{spatial_attention_forward.1} parent=1 // loop_header_branch
      %14 = sbr.rel (%p12) target = $region8
    $region5: #{spatial_attention_forward.1} parent=1 // loop_body
      %s16 = ssub.s32 %s11, 1
      %s17 = ssub.s32 %s11, 2
      %s18 = sadd.s32 %s11, 1
      %s19 = ssub.s32 %s11, %s18
      %p20 = scmp.eq.s32.totalorder %s19, 0
      %s22 = sadd.s32 %s21, 1
      %s23 = scalar_select %p20, %s21, %s22
      %p26 = pneg %p20
      %p27 = scmp.eq.s32.totalorder %s11, 1
      %p28 = por %p26, %p27
      %p29 = scmp.ne.s32.totalorder %s21, %s24
      %p30 = scmp.eq.s32.totalorder %s11, 0
      %p31 = por %p29, %p30
      %p32 = scmp.ne.s32.totalorder %s21, %s24
      %p33 = scmp.eq.s32.totalorder %s16, 1
      %p34 = por %p32, %p33
      %p35 = scmp.ne.s32.totalorder %s24, %s25
      %p36 = scmp.eq.s32.totalorder %s16, 0
      %p37 = por %p35, %p36
      %p38 = scmp.ne.s32.totalorder %s24, %s25
      %p39 = scmp.eq.s32.totalorder %s17, 1
      %p40 = por %p38, %p39
      %p42 = scmp.ne.s32.totalorder %s25, %s41
      %p43 = scmp.eq.s32.totalorder %s17, 0
      %p44 = por %p42, %p43
      %s46 = sadd.s32 %s45, 1
      %p49 = scmp.eq.s32.totalorder %s11, 1
      %p50 = scmp.ne.s32.totalorder %s45, %s47
      %p51 = scmp.eq.s32.totalorder %s11, 0
      %p52 = por %p50, %p51
      %p53 = scmp.ne.s32.totalorder %s45, %s47
      %p54 = scmp.eq.s32.totalorder %s16, 1
      %p55 = por %p53, %p54
      %p56 = scmp.ne.s32.totalorder %s47, %s48
      %p57 = scmp.eq.s32.totalorder %s16, 0
      %p58 = por %p56, %p57
      %p59 = scmp.ne.s32.totalorder %s47, %s48
      %p60 = scmp.eq.s32.totalorder %s17, 1
      %p61 = por %p59, %p60
      %p63 = scmp.ne.s32.totalorder %s48, %s62
      %p64 = scmp.eq.s32.totalorder %s17, 0
      %p65 = por %p63, %p64
      %s66 = ssub.s32 %s11, %s18
      %p67 = scmp.eq.s32.totalorder %s66, 0
      %s69 = sadd.s32 %s68, 1
      %s70 = scalar_select %p67, %s68, %s69
      %p73 = pneg %p67
      %p74 = scmp.eq.s32.totalorder %s11, 1
      %p75 = por %p73, %p74
      %p76 = scmp.ne.s32.totalorder %s68, %s71
      %p77 = scmp.eq.s32.totalorder %s11, 0
      %p78 = por %p76, %p77
      %p79 = scmp.ne.s32.totalorder %s68, %s71
      %p80 = scmp.eq.s32.totalorder %s16, 1
      %p81 = por %p79, %p80
      %p82 = scmp.ne.s32.totalorder %s71, %s72
      %p83 = scmp.eq.s32.totalorder %s16, 0
      %p84 = por %p82, %p83
      %p85 = scmp.ne.s32.totalorder %s71, %s72
      %p86 = scmp.eq.s32.totalorder %s17, 1
      %p87 = por %p85, %p86
      %p89 = scmp.ne.s32.totalorder %s72, %s88
      %p90 = scmp.eq.s32.totalorder %s17, 0
      %p91 = por %p89, %p90
      %p92 = scmp.le.s32.totalorder 1, %s11
      %p93 = scmp.lt.s32.totalorder %s11, 3
      %p94 = pnand %p92, %p93
      %p95 = pneg %p94
      // Predicated region
      $region9: #{spatial_attention_forward.1} parent=5 // pred_check
        _
      $region10: #{spatial_attention_forward.1} parent=5 // pred_check_branch
        %97 = sbr.rel (%p94) target = $region12
      $region11: #{spatial_attention_forward.1} parent=5 // pred_region
        %s98 = ssub.s32 %s11, 1
        // Predicated region
        $region13: #{spatial_attention_forward.1} parent=11 // pred_check
          %p99 = pneg %p58
        $region14: #{spatial_attention_forward.1} parent=11 // pred_check_branch
          %101 = sbr.rel (%p99) target = $region16
        $region15: #{spatial_attention_forward.1} parent=11 // pred_region
          _
        $region16: #{spatial_attention_forward.1} parent=11 // pred_fallthru
          _
      $region12: #{spatial_attention_forward.1} parent=5 // pred_fallthru
        _
      %p102 = scmp.lt.s32.totalorder %s11, 2
      // Predicated region
      $region17: #{spatial_attention_forward.1} parent=5 // pred_check
        %p103 = pneg %p102
      $region18: #{spatial_attention_forward.1} parent=5 // pred_check_branch
        %105 = sbr.rel (%p103) target = $region20
      $region19: #{spatial_attention_forward.1} parent=5 // pred_region
        // Predicated region
        $region21: #{spatial_attention_forward.1} parent=19 // pred_check
          %p106 = pneg %p31
        $region22: #{spatial_attention_forward.1} parent=19 // pred_check_branch
          %108 = sbr.rel (%p106) target = $region24
        $region23: #{spatial_attention_forward.1} parent=19 // pred_region
          %p109 = scmp.lt.s32.totalorder %s11, 1
          %s110 = scalar_select %p109, %s11, 1
          %s111 = smul.addr %s110, 8
          %s112 = smul.addr %s111, 8
          %s113 = scalar_lea.vmem %s0, %s112
        $region24: #{spatial_attention_forward.1} parent=19 // pred_fallthru
          _
      $region20: #{spatial_attention_forward.1} parent=5 // pred_fallthru
        _
      %p114 = scmp.le.s32.totalorder 1, %s11
      %p115 = scmp.lt.s32.totalorder %s11, 3
      %p116 = pnand %p114, %p115
      %p117 = pneg %p116
      // Predicated region
      $region25: #{spatial_attention_forward.1} parent=5 // pred_check
        _
      $region26: #{spatial_attention_forward.1} parent=5 // pred_check_branch
        %119 = sbr.rel (%p116) target = $region28
      $region27: #{spatial_attention_forward.1} parent=5 // pred_region
        %s120 = ssub.s32 %s11, 1
        %p121 = scmp.lt.s32.totalorder %s16, 1
        %s122 = scalar_select %p121, %s16, 1
        %s123 = smul.addr %s122, 8
        %s124 = smul.addr %s123, 8
        %s125 = scalar_lea.vmem %s0, %s124
        %p126 = pneg %p37
        %p127 = pneg %p34
        %p128 = pneg %p58
        %p129 = pneg %p55
        %p130 = pneg %p84
        %p131 = pneg %p81
        %s132 = sand.u32 %s71, 1
        %s133 = scalar_lea.sflag [#allocation4], %s132
        %s134 = sand.u32 %s71, 1
        %s135 = smul.addr %s134, 16
        %s136 = scalar_lea.vmem [#allocation3], %s135
        %p137 = scmp.lt.s32.totalorder %s16, 1
        %s138 = scalar_select %p137, %s16, 1
        %s139 = smul.addr %s138, 8
        %s140 = smul.addr %s139, 8
        %s141 = scalar_lea.vmem %s0, %s140
        %v142 = vld [vmem:[%s141] sm:$0xff]
        %v143 = vld [vmem:[%s141 + $0x8] sm:$0xff]
        %s144 = scalar_lea.vmem %s141, 16
        %v145 = vld [vmem:[%s144] sm:$0xff]
        %v146 = vld [vmem:[%s144 + $0x8] sm:$0xff]
        %v147 = vadd.f32 %v142, %v145
        %v148 = vadd.f32 %v143, %v146
        %v149 = vmax.f32 %v142, %v145
        %v150 = vmax.f32 %v143, %v146
        %s151 = scalar_lea.vmem %s141, 32
        %v152 = vld [vmem:[%s151] sm:$0xff]
        %v153 = vld [vmem:[%s151 + $0x8] sm:$0xff]
        %v154 = vadd.f32 %v147, %v152
        %v155 = vadd.f32 %v148, %v153
        %v156 = vmax.f32 %v149, %v152
        %v157 = vmax.f32 %v150, %v153
        %s158 = scalar_lea.vmem %s141, 48
        %v159 = vld [vmem:[%s158] sm:$0xff]
        %v160 = vld [vmem:[%s158 + $0x8] sm:$0xff]
        %v161 = vadd.f32 %v154, %v159
        %v162 = vadd.f32 %v155, %v160
        %v163 = vmax.f32 %v156, %v159
        %v164 = vmax.f32 %v157, %v160
        %v165 = vmul.f32 %v161, 0.25
        %v166 = vmul.f32 %v162, 0.25
        %vm167 = vcmask 261120
        %168 = vst.msk [vmem:[#allocation2] sm:$0xff] %vm167, 0.0
        %169 = vst.msk [vmem:[#allocation2 + $0x8] sm:$0xff] %vm167, 0.0
        %vm170 = vcmask 259072
        %171 = vst.msk [vmem:[#allocation2 + $0x10] sm:$0x3f] %vm170, 0.0
        %174 = vrot.lane.b32.xlu0 %v163, 16
        %v175 = vpop.permute.xlu0 %174
        %176 = vrot.lane.b32.xlu0 %v164, 16
        %v177 = vpop.permute.xlu0 %176
        %vm180 = vcmask 130048
        %v181 = vsel %vm180, %v165, %v175
        %v182 = vsel %vm180, %v166, %v177
        %183 = vst.msk [vmem:[#allocation2 + $0x3] sm:$0xff] %vm167, %v181
        %184 = vst.msk [vmem:[#allocation2 + $0xb] sm:$0xff] %vm167, %v182
        %v185 = vld [vmem:[#allocation2] sm:$0xff]
        %v186 = vld [vmem:[#allocation2 + $0x8] sm:$0xff]
        %v187 = vld [vmem:[%s1] sm:$0xff]
        %v188 = vld [vmem:[%s1 + $0x8] sm:$0xff]
        %v189 = vld [vmem:[%s1 + $0x10] sm:$0xff]
        %v190 = vld [vmem:[%s1 + $0x18] sm:$0xff]
        %v191 = vld [vmem:[#allocation2 + $0x1] sm:$0xff]
        %v192 = vld [vmem:[#allocation2 + $0x9] sm:$0xff]
        %s193 = scalar_lea.vmem %s1, 32
        %v194 = vld [vmem:[%s193] sm:$0xff]
        %v195 = vld [vmem:[%s193 + $0x8] sm:$0xff]
        %v196 = vld [vmem:[%s193 + $0x10] sm:$0xff]
        %v197 = vld [vmem:[%s193 + $0x18] sm:$0xff]
        %v199 = vsel %vm167, %v191, 0
        %v202 = vsel %vm167, %v192, 0
        %204 = vmatpush.msra.mxu0 0.0
        %205 = vmatpush.msra.mxu0 0.0
        %206 = vmatpush.msra.mxu0 0.0
        %207 = vmatpush.msra.mxu0 0.0
        %208 = vmatpush.msra.mxu0 0.0
        %209 = vmatpush.msra.mxu0 0.0
        %210 = vmatpush.msra.mxu0 0.0
        %211 = vmatpush.msra.mxu0 0.0
        %212 = vmatpush.msra.mxu0 0.0
        %213 = vmatpush.msra.mxu0 0.0
        %214 = vmatpush.msra.mxu0 0.0
        %215 = vmatpush.msra.mxu0 0.0
        %v216 = vand.u32 %v197, 4294901760
        %217 = vmatpush.msra.mxu0 %v216
        %v218 = vand.u32 %v196, 4294901760
        %219 = vmatpush.msra.mxu0 %v218
        %v220 = vand.u32 %v195, 4294901760
        %221 = vmatpush.msra.mxu0 %v220
        %v222 = vand.u32 %v194, 4294901760
        %223 = vmatpush.msra.mxu0 %v222
        %v224 = vand.u32 %v199, 4294901760
        %v225 = vsub.f32 %v199, %v224
        %v226 = vand.u32 %v225, 4294901760
        %v227 = vsub.f32 %v225, %v226
        %v228 = vand.u32 %v227, 4294901760
        %229 = vmatmul.f32.gmra.mxu0 %v228
        %v230 = vpop.f32.mrf.mxu0
        %v231 = vadd.f32 0.0, %v230
        %v232 = vand.u32 %v202, 4294901760
        %v233 = vsub.f32 %v202, %v232
        %v234 = vand.u32 %v233, 4294901760
        %v235 = vsub.f32 %v233, %v234
        %v236 = vand.u32 %v235, 4294901760
        %237 = vmatmul.f32.gmra.mxu0 %v236
        %v238 = vpop.f32.mrf.mxu0
        %v239 = vadd.f32 0.0, %v238
        %240 = vdwg.mxu0
        %241 = vmatpush.msra.mxu0 0.0
        %242 = vmatpush.msra.mxu0 0.0
        %243 = vmatpush.msra.mxu0 0.0
        %244 = vmatpush.msra.mxu0 0.0
        %245 = vmatpush.msra.mxu0 0.0
        %246 = vmatpush.msra.mxu0 0.0
        %247 = vmatpush.msra.mxu0 0.0
        %248 = vmatpush.msra.mxu0 0.0
        %249 = vmatpush.msra.mxu0 0.0
        %250 = vmatpush.msra.mxu0 0.0
        %251 = vmatpush.msra.mxu0 0.0
        %252 = vmatpush.msra.mxu0 0.0
        %v253 = vand.u32 %v197, 4294901760
        %v254 = vsub.f32 %v197, %v253
        %v255 = vand.u32 %v254, 4294901760
        %v256 = vsub.f32 %v254, %v255
        %v257 = vand.u32 %v256, 4294901760
        %258 = vmatpush.msra.mxu0 %v257
        %v259 = vand.u32 %v196, 4294901760
        %v260 = vsub.f32 %v196, %v259
        %v261 = vand.u32 %v260, 4294901760
        %v262 = vsub.f32 %v260, %v261
        %v263 = vand.u32 %v262, 4294901760
        %264 = vmatpush.msra.mxu0 %v263
        %v265 = vand.u32 %v195, 4294901760
        %v266 = vsub.f32 %v195, %v265
        %v267 = vand.u32 %v266, 4294901760
        %v268 = vsub.f32 %v266, %v267
        %v269 = vand.u32 %v268, 4294901760
        %270 = vmatpush.msra.mxu0 %v269
        %v271 = vand.u32 %v194, 4294901760
        %v272 = vsub.f32 %v194, %v271
        %v273 = vand.u32 %v272, 4294901760
        %v274 = vsub.f32 %v272, %v273
        %v275 = vand.u32 %v274, 4294901760
        %276 = vmatpush.msra.mxu0 %v275
        %v277 = vand.u32 %v199, 4294901760
        %278 = vmatmul.f32.gmra.mxu0 %v277
        %v279 = vpop.f32.mrf.mxu0
        %v280 = vadd.f32 %v231, %v279
        %v281 = vand.u32 %v202, 4294901760
        %282 = vmatmul.f32.gmra.mxu0 %v281
        %v283 = vpop.f32.mrf.mxu0
        %v284 = vadd.f32 %v239, %v283
        %285 = vdwg.mxu0
        %286 = vmatpush.msra.mxu0 0.0
        %287 = vmatpush.msra.mxu0 0.0
        %288 = vmatpush.msra.mxu0 0.0
        %289 = vmatpush.msra.mxu0 0.0
        %290 = vmatpush.msra.mxu0 0.0
        %291 = vmatpush.msra.mxu0 0.0
        %292 = vmatpush.msra.mxu0 0.0
        %293 = vmatpush.msra.mxu0 0.0
        %294 = vmatpush.msra.mxu0 0.0
        %295 = vmatpush.msra.mxu0 0.0
        %296 = vmatpush.msra.mxu0 0.0
        %297 = vmatpush.msra.mxu0 0.0
        %v298 = vand.u32 %v197, 4294901760
        %v299 = vsub.f32 %v197, %v298
        %300 = vmatpush.msra.mxu0 %v299
        %v301 = vand.u32 %v196, 4294901760
        %v302 = vsub.f32 %v196, %v301
        %303 = vmatpush.msra.mxu0 %v302
        %v304 = vand.u32 %v195, 4294901760
        %v305 = vsub.f32 %v195, %v304
        %306 = vmatpush.msra.mxu0 %v305
        %v307 = vand.u32 %v194, 4294901760
        %v308 = vsub.f32 %v194, %v307
        %309 = vmatpush.msra.mxu0 %v308
        %v310 = vand.u32 %v199, 4294901760
        %v311 = vsub.f32 %v199, %v310
        %312 = vmatmul.f32.gmra.mxu0 %v311
        %v313 = vpop.f32.mrf.mxu0
        %v314 = vadd.f32 %v280, %v313
        %v315 = vand.u32 %v202, 4294901760
        %v316 = vsub.f32 %v202, %v315
        %317 = vmatmul.f32.gmra.mxu0 %v316
        %v318 = vpop.f32.mrf.mxu0
        %v319 = vadd.f32 %v284, %v318
        %320 = vdwg.mxu0
        %321 = vmatpush.msra.mxu0 0.0
        %322 = vmatpush.msra.mxu0 0.0
        %323 = vmatpush.msra.mxu0 0.0
        %324 = vmatpush.msra.mxu0 0.0
        %325 = vmatpush.msra.mxu0 0.0
        %326 = vmatpush.msra.mxu0 0.0
        %327 = vmatpush.msra.mxu0 0.0
        %328 = vmatpush.msra.mxu0 0.0
        %329 = vmatpush.msra.mxu0 0.0
        %330 = vmatpush.msra.mxu0 0.0
        %331 = vmatpush.msra.mxu0 0.0
        %332 = vmatpush.msra.mxu0 0.0
        %v333 = vand.u32 %v197, 4294901760
        %334 = vmatpush.msra.mxu0 %v333
        %v335 = vand.u32 %v196, 4294901760
        %336 = vmatpush.msra.mxu0 %v335
        %v337 = vand.u32 %v195, 4294901760
        %338 = vmatpush.msra.mxu0 %v337
        %v339 = vand.u32 %v194, 4294901760
        %340 = vmatpush.msra.mxu0 %v339
        %v341 = vand.u32 %v199, 4294901760
        %v342 = vsub.f32 %v199, %v341
        %v343 = vand.u32 %v342, 4294901760
        %344 = vmatmul.f32.gmra.mxu0 %v343
        %v345 = vpop.f32.mrf.mxu0
        %v346 = vadd.f32 %v314, %v345
        %v347 = vand.u32 %v202, 4294901760
        %v348 = vsub.f32 %v202, %v347
        %v349 = vand.u32 %v348, 4294901760
        %350 = vmatmul.f32.gmra.mxu0 %v349
        %v351 = vpop.f32.mrf.mxu0
        %v352 = vadd.f32 %v319, %v351
        %353 = vdwg.mxu0
        %354 = vmatpush.msra.mxu0 0.0
        %355 = vmatpush.msra.mxu0 0.0
        %356 = vmatpush.msra.mxu0 0.0
        %357 = vmatpush.msra.mxu0 0.0
        %358 = vmatpush.msra.mxu0 0.0
        %359 = vmatpush.msra.mxu0 0.0
        %360 = vmatpush.msra.mxu0 0.0
        %361 = vmatpush.msra.mxu0 0.0
        %362 = vmatpush.msra.mxu0 0.0
        %363 = vmatpush.msra.mxu0 0.0
        %364 = vmatpush.msra.mxu0 0.0
        %365 = vmatpush.msra.mxu0 0.0
        %v366 = vand.u32 %v197, 4294901760
        %v367 = vsub.f32 %v197, %v366
        %v368 = vand.u32 %v367, 4294901760
        %369 = vmatpush.msra.mxu0 %v368
        %v370 = vand.u32 %v196, 4294901760
        %v371 = vsub.f32 %v196, %v370
        %v372 = vand.u32 %v371, 4294901760
        %373 = vmatpush.msra.mxu0 %v372
        %v374 = vand.u32 %v195, 4294901760
        %v375 = vsub.f32 %v195, %v374
        %v376 = vand.u32 %v375, 4294901760
        %377 = vmatpush.msra.mxu0 %v376
        %v378 = vand.u32 %v194, 4294901760
        %v379 = vsub.f32 %v194, %v378
        %v380 = vand.u32 %v379, 4294901760
        %381 = vmatpush.msra.mxu0 %v380
        %v382 = vand.u32 %v199, 4294901760
        %383 = vmatmul.f32.gmra.mxu0 %v382
        %v384 = vpop.f32.mrf.mxu0
        %v385 = vadd.f32 %v346, %v384
        %v386 = vand.u32 %v202, 4294901760
        %387 = vmatmul.f32.gmra.mxu0 %v386
        %v388 = vpop.f32.mrf.mxu0
        %v389 = vadd.f32 %v352, %v388
        %390 = vdwg.mxu0
        %391 = vmatpush.msra.mxu0 0.0
        %392 = vmatpush.msra.mxu0 0.0
        %393 = vmatpush.msra.mxu0 0.0
        %394 = vmatpush.msra.mxu0 0.0
        %395 = vmatpush.msra.mxu0 0.0
        %396 = vmatpush.msra.mxu0 0.0
        %397 = vmatpush.msra.mxu0 0.0
        %398 = vmatpush.msra.mxu0 0.0
        %399 = vmatpush.msra.mxu0 0.0
        %400 = vmatpush.msra.mxu0 0.0
        %401 = vmatpush.msra.mxu0 0.0
        %402 = vmatpush.msra.mxu0 0.0
        %v403 = vand.u32 %v197, 4294901760
        %404 = vmatpush.msra.mxu0 %v403
        %v405 = vand.u32 %v196, 4294901760
        %406 = vmatpush.msra.mxu0 %v405
        %v407 = vand.u32 %v195, 4294901760
        %408 = vmatpush.msra.mxu0 %v407
        %v409 = vand.u32 %v194, 4294901760
        %410 = vmatpush.msra.mxu0 %v409
        %v411 = vand.u32 %v199, 4294901760
        %412 = vmatmul.f32.gmra.mxu0 %v411
        %v413 = vpop.f32.mrf.mxu0
        %v414 = vadd.f32 %v385, %v413
        %v415 = vand.u32 %v202, 4294901760
        %416 = vmatmul.f32.gmra.mxu0 %v415
        %v417 = vpop.f32.mrf.mxu0
        %v418 = vadd.f32 %v389, %v417
        %419 = vdwg.mxu0
        %v421 = vsel %vm167, %v185, 0
        %v424 = vsel %vm167, %v186, 0
        %426 = vmatpush.msra.mxu0 0.0
        %427 = vmatpush.msra.mxu0 0.0
        %428 = vmatpush.msra.mxu0 0.0
        %429 = vmatpush.msra.mxu0 0.0
        %430 = vmatpush.msra.mxu0 0.0
        %431 = vmatpush.msra.mxu0 0.0
        %432 = vmatpush.msra.mxu0 0.0
        %433 = vmatpush.msra.mxu0 0.0
        %434 = vmatpush.msra.mxu0 0.0
        %435 = vmatpush.msra.mxu0 0.0
        %436 = vmatpush.msra.mxu0 0.0
        %437 = vmatpush.msra.mxu0 0.0
        %v438 = vand.u32 %v190, 4294901760
        %439 = vmatpush.msra.mxu0 %v438
        %v440 = vand.u32 %v189, 4294901760
        %441 = vmatpush.msra.mxu0 %v440
        %v442 = vand.u32 %v188, 4294901760
        %443 = vmatpush.msra.mxu0 %v442
        %v444 = vand.u32 %v187, 4294901760
        %445 = vmatpush.msra.mxu0 %v444
        %v446 = vand.u32 %v421, 4294901760
        %v447 = vsub.f32 %v421, %v446
        %v448 = vand.u32 %v447, 4294901760
        %v449 = vsub.f32 %v447, %v448
        %v450 = vand.u32 %v449, 4294901760
        %451 = vmatmul.f32.gmra.mxu0 %v450
        %v452 = vpop.f32.mrf.mxu0
        %v453 = vadd.f32 %v414, %v452
        %v454 = vand.u32 %v424, 4294901760
        %v455 = vsub.f32 %v424, %v454
        %v456 = vand.u32 %v455, 4294901760
        %v457 = vsub.f32 %v455, %v456
        %v458 = vand.u32 %v457, 4294901760
        %459 = vmatmul.f32.gmra.mxu0 %v458
        %v460 = vpop.f32.mrf.mxu0
        %v461 = vadd.f32 %v418, %v460
        %462 = vdwg.mxu0
        %463 = vmatpush.msra.mxu0 0.0
        %464 = vmatpush.msra.mxu0 0.0
        %465 = vmatpush.msra.mxu0 0.0
        %466 = vmatpush.msra.mxu0 0.0
        %467 = vmatpush.msra.mxu0 0.0
        %468 = vmatpush.msra.mxu0 0.0
        %469 = vmatpush.msra.mxu0 0.0
        %470 = vmatpush.msra.mxu0 0.0
        %471 = vmatpush.msra.mxu0 0.0
        %472 = vmatpush.msra.mxu0 0.0
        %473 = vmatpush.msra.mxu0 0.0
        %474 = vmatpush.msra.mxu0 0.0
        %v475 = vand.u32 %v190, 4294901760
        %v476 = vsub.f32 %v190, %v475
        %v477 = vand.u32 %v476, 4294901760
        %v478 = vsub.f32 %v476, %v477
        %v479 = vand.u32 %v478, 4294901760
        %480 = vmatpush.msra.mxu0 %v479
        %v481 = vand.u32 %v189, 4294901760
        %v482 = vsub.f32 %v189, %v481
        %v483 = vand.u32 %v482, 4294901760
        %v484 = vsub.f32 %v482, %v483
        %v485 = vand.u32 %v484, 4294901760
        %486 = vmatpush.msra.mxu0 %v485
        %v487 = vand.u32 %v188, 4294901760
        %v488 = vsub.f32 %v188, %v487
        %v489 = vand.u32 %v488, 4294901760
        %v490 = vsub.f32 %v488, %v489
        %v491 = vand.u32 %v490, 4294901760
        %492 = vmatpush.msra.mxu0 %v491
        %v493 = vand.u32 %v187, 4294901760
        %v494 = vsub.f32 %v187, %v493
        %v495 = vand.u32 %v494, 4294901760
        %v496 = vsub.f32 %v494, %v495
        %v497 = vand.u32 %v496, 4294901760
        %498 = vmatpush.msra.mxu0 %v497
        %v499 = vand.u32 %v421, 4294901760
        %500 = vmatmul.f32.gmra.mxu0 %v499
        %v501 = vpop.f32.mrf.mxu0
        %v502 = vadd.f32 %v453, %v501
        %v503 = vand.u32 %v424, 4294901760
        %504 = vmatmul.f32.gmra.mxu0 %v503
        %v505 = vpop.f32.mrf.mxu0
        %v506 = vadd.f32 %v461, %v505
        %507 = vdwg.mxu0
        %508 = vmatpush.msra.mxu0 0.0
        %509 = vmatpush.msra.mxu0 0.0
        %510 = vmatpush.msra.mxu0 0.0
        %511 = vmatpush.msra.mxu0 0.0
        %512 = vmatpush.msra.mxu0 0.0
        %513 = vmatpush.msra.mxu0 0.0
        %514 = vmatpush.msra.mxu0 0.0
        %515 = vmatpush.msra.mxu0 0.0
        %516 = vmatpush.msra.mxu0 0.0
        %517 = vmatpush.msra.mxu0 0.0
        %518 = vmatpush.msra.mxu0 0.0
        %519 = vmatpush.msra.mxu0 0.0
        %v520 = vand.u32 %v190, 4294901760
        %v521 = vsub.f32 %v190, %v520
        %522 = vmatpush.msra.mxu0 %v521
        %v523 = vand.u32 %v189, 4294901760
        %v524 = vsub.f32 %v189, %v523
        %525 = vmatpush.msra.mxu0 %v524
        %v526 = vand.u32 %v188, 4294901760
        %v527 = vsub.f32 %v188, %v526
        %528 = vmatpush.msra.mxu0 %v527
        %v529 = vand.u32 %v187, 4294901760
        %v530 = vsub.f32 %v187, %v529
        %531 = vmatpush.msra.mxu0 %v530
        %v532 = vand.u32 %v421, 4294901760
        %v533 = vsub.f32 %v421, %v532
        %534 = vmatmul.f32.gmra.mxu0 %v533
        %v535 = vpop.f32.mrf.mxu0
        %v536 = vadd.f32 %v502, %v535
        %v537 = vand.u32 %v424, 4294901760
        %v538 = vsub.f32 %v424, %v537
        %539 = vmatmul.f32.gmra.mxu0 %v538
        %v540 = vpop.f32.mrf.mxu0
        %v541 = vadd.f32 %v506, %v540
        %542 = vdwg.mxu0
        %543 = vmatpush.msra.mxu0 0.0
        %544 = vmatpush.msra.mxu0 0.0
        %545 = vmatpush.msra.mxu0 0.0
        %546 = vmatpush.msra.mxu0 0.0
        %547 = vmatpush.msra.mxu0 0.0
        %548 = vmatpush.msra.mxu0 0.0
        %549 = vmatpush.msra.mxu0 0.0
        %550 = vmatpush.msra.mxu0 0.0
        %551 = vmatpush.msra.mxu0 0.0
        %552 = vmatpush.msra.mxu0 0.0
        %553 = vmatpush.msra.mxu0 0.0
        %554 = vmatpush.msra.mxu0 0.0
        %v555 = vand.u32 %v190, 4294901760
        %556 = vmatpush.msra.mxu0 %v555
        %v557 = vand.u32 %v189, 4294901760
        %558 = vmatpush.msra.mxu0 %v557
        %v559 = vand.u32 %v188, 4294901760
        %560 = vmatpush.msra.mxu0 %v559
        %v561 = vand.u32 %v187, 4294901760
        %562 = vmatpush.msra.mxu0 %v561
        %v563 = vand.u32 %v421, 4294901760
        %v564 = vsub.f32 %v421, %v563
        %v565 = vand.u32 %v564, 4294901760
        %566 = vmatmul.f32.gmra.mxu0 %v565
        %v567 = vpop.f32.mrf.mxu0
        %v568 = vadd.f32 %v536, %v567
        %v569 = vand.u32 %v424, 4294901760
        %v570 = vsub.f32 %v424, %v569
        %v571 = vand.u32 %v570, 4294901760
        %572 = vmatmul.f32.gmra.mxu0 %v571
        %v573 = vpop.f32.mrf.mxu0
        %v574 = vadd.f32 %v541, %v573
        %575 = vdwg.mxu0
        %576 = vmatpush.msra.mxu0 0.0
        %577 = vmatpush.msra.mxu0 0.0
        %578 = vmatpush.msra.mxu0 0.0
        %579 = vmatpush.msra.mxu0 0.0
        %580 = vmatpush.msra.mxu0 0.0
        %581 = vmatpush.msra.mxu0 0.0
        %582 = vmatpush.msra.mxu0 0.0
        %583 = vmatpush.msra.mxu0 0.0
        %584 = vmatpush.msra.mxu0 0.0
        %585 = vmatpush.msra.mxu0 0.0
        %586 = vmatpush.msra.mxu0 0.0
        %587 = vmatpush.msra.mxu0 0.0
        %v588 = vand.u32 %v190, 4294901760
        %v589 = vsub.f32 %v190, %v588
        %v590 = vand.u32 %v589, 4294901760
        %591 = vmatpush.msra.mxu0 %v590
        %v592 = vand.u32 %v189, 4294901760
        %v593 = vsub.f32 %v189, %v592
        %v594 = vand.u32 %v593, 4294901760
        %595 = vmatpush.msra.mxu0 %v594
        %v596 = vand.u32 %v188, 4294901760
        %v597 = vsub.f32 %v188, %v596
        %v598 = vand.u32 %v597, 4294901760
        %599 = vmatpush.msra.mxu0 %v598
        %v600 = vand.u32 %v187, 4294901760
        %v601 = vsub.f32 %v187, %v600
        %v602 = vand.u32 %v601, 4294901760
        %603 = vmatpush.msra.mxu0 %v602
        %v604 = vand.u32 %v421, 4294901760
        %605 = vmatmul.f32.gmra.mxu0 %v604
        %v606 = vpop.f32.mrf.mxu0
        %v607 = vadd.f32 %v568, %v606
        %v608 = vand.u32 %v424, 4294901760
        %609 = vmatmul.f32.gmra.mxu0 %v608
        %v610 = vpop.f32.mrf.mxu0
        %v611 = vadd.f32 %v574, %v610
        %612 = vdwg.mxu0
        %613 = vmatpush.msra.mxu0 0.0
        %614 = vmatpush.msra.mxu0 0.0
        %615 = vmatpush.msra.mxu0 0.0
        %616 = vmatpush.msra.mxu0 0.0
        %617 = vmatpush.msra.mxu0 0.0
        %618 = vmatpush.msra.mxu0 0.0
        %619 = vmatpush.msra.mxu0 0.0
        %620 = vmatpush.msra.mxu0 0.0
        %621 = vmatpush.msra.mxu0 0.0
        %622 = vmatpush.msra.mxu0 0.0
        %623 = vmatpush.msra.mxu0 0.0
        %624 = vmatpush.msra.mxu0 0.0
        %v625 = vand.u32 %v190, 4294901760
        %626 = vmatpush.msra.mxu0 %v625
        %v627 = vand.u32 %v189, 4294901760
        %628 = vmatpush.msra.mxu0 %v627
        %v629 = vand.u32 %v188, 4294901760
        %630 = vmatpush.msra.mxu0 %v629
        %v631 = vand.u32 %v187, 4294901760
        %632 = vmatpush.msra.mxu0 %v631
        %v633 = vand.u32 %v421, 4294901760
        %634 = vmatmul.f32.gmra.mxu0 %v633
        %v635 = vpop.f32.mrf.mxu0
        %v636 = vadd.f32 %v607, %v635
        %v637 = vand.u32 %v424, 4294901760
        %638 = vmatmul.f32.gmra.mxu0 %v637
        %v639 = vpop.f32.mrf.mxu0
        %v640 = vadd.f32 %v611, %v639
        %641 = vdwg.mxu0
        %v642 = vld [vmem:[#allocation2 + $0x2] sm:$0xff]
        %v643 = vld [vmem:[#allocation2 + $0xa] sm:$0xff]
        %s644 = scalar_lea.vmem %s1, 64
        %v645 = vld [vmem:[%s644] sm:$0xff]
        %v646 = vld [vmem:[%s644 + $0x8] sm:$0xff]
        %v647 = vld [vmem:[%s644 + $0x10] sm:$0xff]
        %v648 = vld [vmem:[%s644 + $0x18] sm:$0xff]
        %v650 = vsel %vm167, %v642, 0
        %v653 = vsel %vm167, %v643, 0
        %655 = vmatpush.msra.mxu0 0.0
        %656 = vmatpush.msra.mxu0 0.0
        %657 = vmatpush.msra.mxu0 0.0
        %658 = vmatpush.msra.mxu0 0.0
        %659 = vmatpush.msra.mxu0 0.0
        %660 = vmatpush.msra.mxu0 0.0
        %661 = vmatpush.msra.mxu0 0.0
        %662 = vmatpush.msra.mxu0 0.0
        %663 = vmatpush.msra.mxu0 0.0
        %664 = vmatpush.msra.mxu0 0.0
        %665 = vmatpush.msra.mxu0 0.0
        %666 = vmatpush.msra.mxu0 0.0
        %v667 = vand.u32 %v648, 4294901760
        %668 = vmatpush.msra.mxu0 %v667
        %v669 = vand.u32 %v647, 4294901760
        %670 = vmatpush.msra.mxu0 %v669
        %v671 = vand.u32 %v646, 4294901760
        %672 = vmatpush.msra.mxu0 %v671
        %v673 = vand.u32 %v645, 4294901760
        %674 = vmatpush.msra.mxu0 %v673
        %v675 = vand.u32 %v650, 4294901760
        %v676 = vsub.f32 %v650, %v675
        %v677 = vand.u32 %v676, 4294901760
        %v678 = vsub.f32 %v676, %v677
        %v679 = vand.u32 %v678, 4294901760
        %680 = vmatmul.f32.gmra.mxu0 %v679
        %v681 = vpop.f32.mrf.mxu0
        %v682 = vadd.f32 0.0, %v681
        %v683 = vand.u32 %v653, 4294901760
        %v684 = vsub.f32 %v653, %v683
        %v685 = vand.u32 %v684, 4294901760
        %v686 = vsub.f32 %v684, %v685
        %v687 = vand.u32 %v686, 4294901760
        %688 = vmatmul.f32.gmra.mxu0 %v687
        %v689 = vpop.f32.mrf.mxu0
        %v690 = vadd.f32 0.0, %v689
        %691 = vdwg.mxu0
        %692 = vmatpush.msra.mxu0 0.0
        %693 = vmatpush.msra.mxu0 0.0
        %694 = vmatpush.msra.mxu0 0.0
        %695 = vmatpush.msra.mxu0 0.0
        %696 = vmatpush.msra.mxu0 0.0
        %697 = vmatpush.msra.mxu0 0.0
        %698 = vmatpush.msra.mxu0 0.0
        %699 = vmatpush.msra.mxu0 0.0
        %700 = vmatpush.msra.mxu0 0.0
        %701 = vmatpush.msra.mxu0 0.0
        %702 = vmatpush.msra.mxu0 0.0
        %703 = vmatpush.msra.mxu0 0.0
        %v704 = vand.u32 %v648, 4294901760
        %v705 = vsub.f32 %v648, %v704
        %v706 = vand.u32 %v705, 4294901760
        %v707 = vsub.f32 %v705, %v706
        %v708 = vand.u32 %v707, 4294901760
        %709 = vmatpush.msra.mxu0 %v708
        %v710 = vand.u32 %v647, 4294901760
        %v711 = vsub.f32 %v647, %v710
        %v712 = vand.u32 %v711, 4294901760
        %v713 = vsub.f32 %v711, %v712
        %v714 = vand.u32 %v713, 4294901760
        %715 = vmatpush.msra.mxu0 %v714
        %v716 = vand.u32 %v646, 4294901760
        %v717 = vsub.f32 %v646, %v716
        %v718 = vand.u32 %v717, 4294901760
        %v719 = vsub.f32 %v717, %v718
        %v720 = vand.u32 %v719, 4294901760
        %721 = vmatpush.msra.mxu0 %v720
        %v722 = vand.u32 %v645, 4294901760
        %v723 = vsub.f32 %v645, %v722
        %v724 = vand.u32 %v723, 4294901760
        %v725 = vsub.f32 %v723, %v724
        %v726 = vand.u32 %v725, 4294901760
        %727 = vmatpush.msra.mxu0 %v726
        %v728 = vand.u32 %v650, 4294901760
        %729 = vmatmul.f32.gmra.mxu0 %v728
        %v730 = vpop.f32.mrf.mxu0
        %v731 = vadd.f32 %v682, %v730
        %v732 = vand.u32 %v653, 4294901760
        %733 = vmatmul.f32.gmra.mxu0 %v732
        %v734 = vpop.f32.mrf.mxu0
        %v735 = vadd.f32 %v690, %v734
        %736 = vdwg.mxu0
        %737 = vmatpush.msra.mxu0 0.0
        %738 = vmatpush.msra.mxu0 0.0
        %739 = vmatpush.msra.mxu0 0.0
        %740 = vmatpush.msra.mxu0 0.0
        %741 = vmatpush.msra.mxu0 0.0
        %742 = vmatpush.msra.mxu0 0.0
        %743 = vmatpush.msra.mxu0 0.0
        %744 = vmatpush.msra.mxu0 0.0
        %745 = vmatpush.msra.mxu0 0.0
        %746 = vmatpush.msra.mxu0 0.0
        %747 = vmatpush.msra.mxu0 0.0
        %748 = vmatpush.msra.mxu0 0.0
        %v749 = vand.u32 %v648, 4294901760
        %v750 = vsub.f32 %v648, %v749
        %751 = vmatpush.msra.mxu0 %v750
        %v752 = vand.u32 %v647, 4294901760
        %v753 = vsub.f32 %v647, %v752
        %754 = vmatpush.msra.mxu0 %v753
        %v755 = vand.u32 %v646, 4294901760
        %v756 = vsub.f32 %v646, %v755
        %757 = vmatpush.msra.mxu0 %v756
        %v758 = vand.u32 %v645, 4294901760
        %v759 = vsub.f32 %v645, %v758
        %760 = vmatpush.msra.mxu0 %v759
        %v761 = vand.u32 %v650, 4294901760
        %v762 = vsub.f32 %v650, %v761
        %763 = vmatmul.f32.gmra.mxu0 %v762
        %v764 = vpop.f32.mrf.mxu0
        %v765 = vadd.f32 %v731, %v764
        %v766 = vand.u32 %v653, 4294901760
        %v767 = vsub.f32 %v653, %v766
        %768 = vmatmul.f32.gmra.mxu0 %v767
        %v769 = vpop.f32.mrf.mxu0
        %v770 = vadd.f32 %v735, %v769
        %771 = vdwg.mxu0
        %772 = vmatpush.msra.mxu0 0.0
        %773 = vmatpush.msra.mxu0 0.0
        %774 = vmatpush.msra.mxu0 0.0
        %775 = vmatpush.msra.mxu0 0.0
        %776 = vmatpush.msra.mxu0 0.0
        %777 = vmatpush.msra.mxu0 0.0
        %778 = vmatpush.msra.mxu0 0.0
        %779 = vmatpush.msra.mxu0 0.0
        %780 = vmatpush.msra.mxu0 0.0
        %781 = vmatpush.msra.mxu0 0.0
        %782 = vmatpush.msra.mxu0 0.0
        %783 = vmatpush.msra.mxu0 0.0
        %v784 = vand.u32 %v648, 4294901760
        %785 = vmatpush.msra.mxu0 %v784
        %v786 = vand.u32 %v647, 4294901760
        %787 = vmatpush.msra.mxu0 %v786
        %v788 = vand.u32 %v646, 4294901760
        %789 = vmatpush.msra.mxu0 %v788
        %v790 = vand.u32 %v645, 4294901760
        %791 = vmatpush.msra.mxu0 %v790
        %v792 = vand.u32 %v650, 4294901760
        %v793 = vsub.f32 %v650, %v792
        %v794 = vand.u32 %v793, 4294901760
        %795 = vmatmul.f32.gmra.mxu0 %v794
        %v796 = vpop.f32.mrf.mxu0
        %v797 = vadd.f32 %v765, %v796
        %v798 = vand.u32 %v653, 4294901760
        %v799 = vsub.f32 %v653, %v798
        %v800 = vand.u32 %v799, 4294901760
        %801 = vmatmul.f32.gmra.mxu0 %v800
        %v802 = vpop.f32.mrf.mxu0
        %v803 = vadd.f32 %v770, %v802
        %804 = vdwg.mxu0
        %805 = vmatpush.msra.mxu0 0.0
        %806 = vmatpush.msra.mxu0 0.0
        %807 = vmatpush.msra.mxu0 0.0
        %808 = vmatpush.msra.mxu0 0.0
        %809 = vmatpush.msra.mxu0 0.0
        %810 = vmatpush.msra.mxu0 0.0
        %811 = vmatpush.msra.mxu0 0.0
        %812 = vmatpush.msra.mxu0 0.0
        %813 = vmatpush.msra.mxu0 0.0
        %814 = vmatpush.msra.mxu0 0.0
        %815 = vmatpush.msra.mxu0 0.0
        %816 = vmatpush.msra.mxu0 0.0
        %v817 = vand.u32 %v648, 4294901760
        %v818 = vsub.f32 %v648, %v817
        %v819 = vand.u32 %v818, 4294901760
        %820 = vmatpush.msra.mxu0 %v819
        %v821 = vand.u32 %v647, 4294901760
        %v822 = vsub.f32 %v647, %v821
        %v823 = vand.u32 %v822, 4294901760
        %824 = vmatpush.msra.mxu0 %v823
        %v825 = vand.u32 %v646, 4294901760
        %v826 = vsub.f32 %v646, %v825
        %v827 = vand.u32 %v826, 4294901760
        %828 = vmatpush.msra.mxu0 %v827
        %v829 = vand.u32 %v645, 4294901760
        %v830 = vsub.f32 %v645, %v829
        %v831 = vand.u32 %v830, 4294901760
        %832 = vmatpush.msra.mxu0 %v831
        %v833 = vand.u32 %v650, 4294901760
        %834 = vmatmul.f32.gmra.mxu0 %v833
        %v835 = vpop.f32.mrf.mxu0
        %v836 = vadd.f32 %v797, %v835
        %v837 = vand.u32 %v653, 4294901760
        %838 = vmatmul.f32.gmra.mxu0 %v837
        %v839 = vpop.f32.mrf.mxu0
        %v840 = vadd.f32 %v803, %v839
        %841 = vdwg.mxu0
        %842 = vmatpush.msra.mxu0 0.0
        %843 = vmatpush.msra.mxu0 0.0
        %844 = vmatpush.msra.mxu0 0.0
        %845 = vmatpush.msra.mxu0 0.0
        %846 = vmatpush.msra.mxu0 0.0
        %847 = vmatpush.msra.mxu0 0.0
        %848 = vmatpush.msra.mxu0 0.0
        %849 = vmatpush.msra.mxu0 0.0
        %850 = vmatpush.msra.mxu0 0.0
        %851 = vmatpush.msra.mxu0 0.0
        %852 = vmatpush.msra.mxu0 0.0
        %853 = vmatpush.msra.mxu0 0.0
        %v854 = vand.u32 %v648, 4294901760
        %855 = vmatpush.msra.mxu0 %v854
        %v856 = vand.u32 %v647, 4294901760
        %857 = vmatpush.msra.mxu0 %v856
        %v858 = vand.u32 %v646, 4294901760
        %859 = vmatpush.msra.mxu0 %v858
        %v860 = vand.u32 %v645, 4294901760
        %861 = vmatpush.msra.mxu0 %v860
        %v862 = vand.u32 %v650, 4294901760
        %863 = vmatmul.f32.gmra.mxu0 %v862
        %v864 = vpop.f32.mrf.mxu0
        %v865 = vadd.f32 %v836, %v864
        %v866 = vand.u32 %v653, 4294901760
        %867 = vmatmul.f32.gmra.mxu0 %v866
        %v868 = vpop.f32.mrf.mxu0
        %v869 = vadd.f32 %v840, %v868
        %870 = vdwg.mxu0
        %v871 = vadd.f32 %v636, %v865
        %v872 = vadd.f32 %v640, %v869
        %v873 = vld [vmem:[#allocation2 + $0x3] sm:$0xff]
        %v874 = vld [vmem:[#allocation2 + $0xb] sm:$0xff]
        %s875 = scalar_lea.vmem %s1, 96
        %v876 = vld [vmem:[%s875] sm:$0xff]
        %v877 = vld [vmem:[%s875 + $0x8] sm:$0xff]
        %v878 = vld [vmem:[%s875 + $0x10] sm:$0xff]
        %v879 = vld [vmem:[%s875 + $0x18] sm:$0xff]
        %v881 = vsel %vm167, %v873, 0
        %v884 = vsel %vm167, %v874, 0
        %886 = vmatpush.msra.mxu0 0.0
        %887 = vmatpush.msra.mxu0 0.0
        %888 = vmatpush.msra.mxu0 0.0
        %889 = vmatpush.msra.mxu0 0.0
        %890 = vmatpush.msra.mxu0 0.0
        %891 = vmatpush.msra.mxu0 0.0
        %892 = vmatpush.msra.mxu0 0.0
        %893 = vmatpush.msra.mxu0 0.0
        %894 = vmatpush.msra.mxu0 0.0
        %895 = vmatpush.msra.mxu0 0.0
        %896 = vmatpush.msra.mxu0 0.0
        %897 = vmatpush.msra.mxu0 0.0
        %v898 = vand.u32 %v879, 4294901760
        %899 = vmatpush.msra.mxu0 %v898
        %v900 = vand.u32 %v878, 4294901760
        %901 = vmatpush.msra.mxu0 %v900
        %v902 = vand.u32 %v877, 4294901760
        %903 = vmatpush.msra.mxu0 %v902
        %v904 = vand.u32 %v876, 4294901760
        %905 = vmatpush.msra.mxu0 %v904
        %v906 = vand.u32 %v881, 4294901760
        %v907 = vsub.f32 %v881, %v906
        %v908 = vand.u32 %v907, 4294901760
        %v909 = vsub.f32 %v907, %v908
        %v910 = vand.u32 %v909, 4294901760
        %911 = vmatmul.f32.gmra.mxu0 %v910
        %v912 = vpop.f32.mrf.mxu0
        %v913 = vadd.f32 0.0, %v912
        %v914 = vand.u32 %v884, 4294901760
        %v915 = vsub.f32 %v884, %v914
        %v916 = vand.u32 %v915, 4294901760
        %v917 = vsub.f32 %v915, %v916
        %v918 = vand.u32 %v917, 4294901760
        %919 = vmatmul.f32.gmra.mxu0 %v918
        %v920 = vpop.f32.mrf.mxu0
        %v921 = vadd.f32 0.0, %v920
        %922 = vdwg.mxu0
        %923 = vmatpush.msra.mxu0 0.0
        %924 = vmatpush.msra.mxu0 0.0
        %925 = vmatpush.msra.mxu0 0.0
        %926 = vmatpush.msra.mxu0 0.0
        %927 = vmatpush.msra.mxu0 0.0
        %928 = vmatpush.msra.mxu0 0.0
        %929 = vmatpush.msra.mxu0 0.0
        %930 = vmatpush.msra.mxu0 0.0
        %931 = vmatpush.msra.mxu0 0.0
        %932 = vmatpush.msra.mxu0 0.0
        %933 = vmatpush.msra.mxu0 0.0
        %934 = vmatpush.msra.mxu0 0.0
        %v935 = vand.u32 %v879, 4294901760
        %v936 = vsub.f32 %v879, %v935
        %v937 = vand.u32 %v936, 4294901760
        %v938 = vsub.f32 %v936, %v937
        %v939 = vand.u32 %v938, 4294901760
        %940 = vmatpush.msra.mxu0 %v939
        %v941 = vand.u32 %v878, 4294901760
        %v942 = vsub.f32 %v878, %v941
        %v943 = vand.u32 %v942, 4294901760
        %v944 = vsub.f32 %v942, %v943
        %v945 = vand.u32 %v944, 4294901760
        %946 = vmatpush.msra.mxu0 %v945
        %v947 = vand.u32 %v877, 4294901760
        %v948 = vsub.f32 %v877, %v947
        %v949 = vand.u32 %v948, 4294901760
        %v950 = vsub.f32 %v948, %v949
        %v951 = vand.u32 %v950, 4294901760
        %952 = vmatpush.msra.mxu0 %v951
        %v953 = vand.u32 %v876, 4294901760
        %v954 = vsub.f32 %v876, %v953
        %v955 = vand.u32 %v954, 4294901760
        %v956 = vsub.f32 %v954, %v955
        %v957 = vand.u32 %v956, 4294901760
        %958 = vmatpush.msra.mxu0 %v957
        %v959 = vand.u32 %v881, 4294901760
        %960 = vmatmul.f32.gmra.mxu0 %v959
        %v961 = vpop.f32.mrf.mxu0
        %v962 = vadd.f32 %v913, %v961
        %v963 = vand.u32 %v884, 4294901760
        %964 = vmatmul.f32.gmra.mxu0 %v963
        %v965 = vpop.f32.mrf.mxu0
        %v966 = vadd.f32 %v921, %v965
        %967 = vdwg.mxu0
        %968 = vmatpush.msra.mxu0 0.0
        %969 = vmatpush.msra.mxu0 0.0
        %970 = vmatpush.msra.mxu0 0.0
        %971 = vmatpush.msra.mxu0 0.0
        %972 = vmatpush.msra.mxu0 0.0
        %973 = vmatpush.msra.mxu0 0.0
        %974 = vmatpush.msra.mxu0 0.0
        %975 = vmatpush.msra.mxu0 0.0
        %976 = vmatpush.msra.mxu0 0.0
        %977 = vmatpush.msra.mxu0 0.0
        %978 = vmatpush.msra.mxu0 0.0
        %979 = vmatpush.msra.mxu0 0.0
        %v980 = vand.u32 %v879, 4294901760
        %v981 = vsub.f32 %v879, %v980
        %982 = vmatpush.msra.mxu0 %v981
        %v983 = vand.u32 %v878, 4294901760
        %v984 = vsub.f32 %v878, %v983
        %985 = vmatpush.msra.mxu0 %v984
        %v986 = vand.u32 %v877, 4294901760
        %v987 = vsub.f32 %v877, %v986
        %988 = vmatpush.msra.mxu0 %v987
        %v989 = vand.u32 %v876, 4294901760
        %v990 = vsub.f32 %v876, %v989
        %991 = vmatpush.msra.mxu0 %v990
        %v992 = vand.u32 %v881, 4294901760
        %v993 = vsub.f32 %v881, %v992
        %994 = vmatmul.f32.gmra.mxu0 %v993
        %v995 = vpop.f32.mrf.mxu0
        %v996 = vadd.f32 %v962, %v995
        %v997 = vand.u32 %v884, 4294901760
        %v998 = vsub.f32 %v884, %v997
        %999 = vmatmul.f32.gmra.mxu0 %v998
        %v1000 = vpop.f32.mrf.mxu0
        %v1001 = vadd.f32 %v966, %v1000
        %1002 = vdwg.mxu0
        %1003 = vmatpush.msra.mxu0 0.0
        %1004 = vmatpush.msra.mxu0 0.0
        %1005 = vmatpush.msra.mxu0 0.0
        %1006 = vmatpush.msra.mxu0 0.0
        %1007 = vmatpush.msra.mxu0 0.0
        %1008 = vmatpush.msra.mxu0 0.0
        %1009 = vmatpush.msra.mxu0 0.0
        %1010 = vmatpush.msra.mxu0 0.0
        %1011 = vmatpush.msra.mxu0 0.0
        %1012 = vmatpush.msra.mxu0 0.0
        %1013 = vmatpush.msra.mxu0 0.0
        %1014 = vmatpush.msra.mxu0 0.0
        %v1015 = vand.u32 %v879, 4294901760
        %1016 = vmatpush.msra.mxu0 %v1015
        %v1017 = vand.u32 %v878, 4294901760
        %1018 = vmatpush.msra.mxu0 %v1017
        %v1019 = vand.u32 %v877, 4294901760
        %1020 = vmatpush.msra.mxu0 %v1019
        %v1021 = vand.u32 %v876, 4294901760
        %1022 = vmatpush.msra.mxu0 %v1021
        %v1023 = vand.u32 %v881, 4294901760
        %v1024 = vsub.f32 %v881, %v1023
        %v1025 = vand.u32 %v1024, 4294901760
        %1026 = vmatmul.f32.gmra.mxu0 %v1025
        %v1027 = vpop.f32.mrf.mxu0
        %v1028 = vadd.f32 %v996, %v1027
        %v1029 = vand.u32 %v884, 4294901760
        %v1030 = vsub.f32 %v884, %v1029
        %v1031 = vand.u32 %v1030, 4294901760
        %1032 = vmatmul.f32.gmra.mxu0 %v1031
        %v1033 = vpop.f32.mrf.mxu0
        %v1034 = vadd.f32 %v1001, %v1033
        %1035 = vdwg.mxu0
        %1036 = vmatpush.msra.mxu0 0.0
        %1037 = vmatpush.msra.mxu0 0.0
        %1038 = vmatpush.msra.mxu0 0.0
        %1039 = vmatpush.msra.mxu0 0.0
        %1040 = vmatpush.msra.mxu0 0.0
        %1041 = vmatpush.msra.mxu0 0.0
        %1042 = vmatpush.msra.mxu0 0.0
        %1043 = vmatpush.msra.mxu0 0.0
        %1044 = vmatpush.msra.mxu0 0.0
        %1045 = vmatpush.msra.mxu0 0.0
        %1046 = vmatpush.msra.mxu0 0.0
        %1047 = vmatpush.msra.mxu0 0.0
        %v1048 = vand.u32 %v879, 4294901760
        %v1049 = vsub.f32 %v879, %v1048
        %v1050 = vand.u32 %v1049, 4294901760
        %1051 = vmatpush.msra.mxu0 %v1050
        %v1052 = vand.u32 %v878, 4294901760
        %v1053 = vsub.f32 %v878, %v1052
        %v1054 = vand.u32 %v1053, 4294901760
        %1055 = vmatpush.msra.mxu0 %v1054
        %v1056 = vand.u32 %v877, 4294901760
        %v1057 = vsub.f32 %v877, %v1056
        %v1058 = vand.u32 %v1057, 4294901760
        %1059 = vmatpush.msra.mxu0 %v1058
        %v1060 = vand.u32 %v876, 4294901760
        %v1061 = vsub.f32 %v876, %v1060
        %v1062 = vand.u32 %v1061, 4294901760
        %1063 = vmatpush.msra.mxu0 %v1062
        %v1064 = vand.u32 %v881, 4294901760
        %1065 = vmatmul.f32.gmra.mxu0 %v1064
        %v1066 = vpop.f32.mrf.mxu0
        %v1067 = vadd.f32 %v1028, %v1066
        %v1068 = vand.u32 %v884, 4294901760
        %1069 = vmatmul.f32.gmra.mxu0 %v1068
        %v1070 = vpop.f32.mrf.mxu0
        %v1071 = vadd.f32 %v1034, %v1070
        %1072 = vdwg.mxu0
        %1073 = vmatpush.msra.mxu0 0.0
        %1074 = vmatpush.msra.mxu0 0.0
        %1075 = vmatpush.msra.mxu0 0.0
        %1076 = vmatpush.msra.mxu0 0.0
        %1077 = vmatpush.msra.mxu0 0.0
        %1078 = vmatpush.msra.mxu0 0.0
        %1079 = vmatpush.msra.mxu0 0.0
        %1080 = vmatpush.msra.mxu0 0.0
        %1081 = vmatpush.msra.mxu0 0.0
        %1082 = vmatpush.msra.mxu0 0.0
        %1083 = vmatpush.msra.mxu0 0.0
        %1084 = vmatpush.msra.mxu0 0.0
        %v1085 = vand.u32 %v879, 4294901760
        %1086 = vmatpush.msra.mxu0 %v1085
        %v1087 = vand.u32 %v878, 4294901760
        %1088 = vmatpush.msra.mxu0 %v1087
        %v1089 = vand.u32 %v877, 4294901760
        %1090 = vmatpush.msra.mxu0 %v1089
        %v1091 = vand.u32 %v876, 4294901760
        %1092 = vmatpush.msra.mxu0 %v1091
        %v1093 = vand.u32 %v881, 4294901760
        %1094 = vmatmul.f32.gmra.mxu0 %v1093
        %v1095 = vpop.f32.mrf.mxu0
        %v1096 = vadd.f32 %v1067, %v1095
        %v1097 = vand.u32 %v884, 4294901760
        %1098 = vmatmul.f32.gmra.mxu0 %v1097
        %v1099 = vpop.f32.mrf.mxu0
        %v1100 = vadd.f32 %v1071, %v1099
        %1101 = vdwg.mxu0
        %v1102 = vadd.f32 %v871, %v1096
        %v1103 = vadd.f32 %v872, %v1100
        %v1104 = vld [vmem:[#allocation2 + $0x4] sm:$0xff]
        %v1105 = vld [vmem:[#allocation2 + $0xc] sm:$0xff]
        %s1106 = scalar_lea.vmem %s1, 128
        %v1107 = vld [vmem:[%s1106] sm:$0xff]
        %v1108 = vld [vmem:[%s1106 + $0x8] sm:$0xff]
        %v1109 = vld [vmem:[%s1106 + $0x10] sm:$0xff]
        %v1110 = vld [vmem:[%s1106 + $0x18] sm:$0xff]
        %v1112 = vsel %vm167, %v1104, 0
        %v1115 = vsel %vm167, %v1105, 0
        %1117 = vmatpush.msra.mxu0 0.0
        %1118 = vmatpush.msra.mxu0 0.0
        %1119 = vmatpush.msra.mxu0 0.0
        %1120 = vmatpush.msra.mxu0 0.0
        %1121 = vmatpush.msra.mxu0 0.0
        %1122 = vmatpush.msra.mxu0 0.0
        %1123 = vmatpush.msra.mxu0 0.0
        %1124 = vmatpush.msra.mxu0 0.0
        %1125 = vmatpush.msra.mxu0 0.0
        %1126 = vmatpush.msra.mxu0 0.0
        %1127 = vmatpush.msra.mxu0 0.0
        %1128 = vmatpush.msra.mxu0 0.0
        %v1129 = vand.u32 %v1110, 4294901760
        %1130 = vmatpush.msra.mxu0 %v1129
        %v1131 = vand.u32 %v1109, 4294901760
        %1132 = vmatpush.msra.mxu0 %v1131
        %v1133 = vand.u32 %v1108, 4294901760
        %1134 = vmatpush.msra.mxu0 %v1133
        %v1135 = vand.u32 %v1107, 4294901760
        %1136 = vmatpush.msra.mxu0 %v1135
        %v1137 = vand.u32 %v1112, 4294901760
        %v1138 = vsub.f32 %v1112, %v1137
        %v1139 = vand.u32 %v1138, 4294901760
        %v1140 = vsub.f32 %v1138, %v1139
        %v1141 = vand.u32 %v1140, 4294901760
        %1142 = vmatmul.f32.gmra.mxu0 %v1141
        %v1143 = vpop.f32.mrf.mxu0
        %v1144 = vadd.f32 0.0, %v1143
        %v1145 = vand.u32 %v1115, 4294901760
        %v1146 = vsub.f32 %v1115, %v1145
        %v1147 = vand.u32 %v1146, 4294901760
        %v1148 = vsub.f32 %v1146, %v1147
        %v1149 = vand.u32 %v1148, 4294901760
        %1150 = vmatmul.f32.gmra.mxu0 %v1149
        %v1151 = vpop.f32.mrf.mxu0
        %v1152 = vadd.f32 0.0, %v1151
        %1153 = vdwg.mxu0
        %1154 = vmatpush.msra.mxu0 0.0
        %1155 = vmatpush.msra.mxu0 0.0
        %1156 = vmatpush.msra.mxu0 0.0
        %1157 = vmatpush.msra.mxu0 0.0
        %1158 = vmatpush.msra.mxu0 0.0
        %1159 = vmatpush.msra.mxu0 0.0
        %1160 = vmatpush.msra.mxu0 0.0
        %1161 = vmatpush.msra.mxu0 0.0
        %1162 = vmatpush.msra.mxu0 0.0
        %1163 = vmatpush.msra.mxu0 0.0
        %1164 = vmatpush.msra.mxu0 0.0
        %1165 = vmatpush.msra.mxu0 0.0
        %v1166 = vand.u32 %v1110, 4294901760
        %v1167 = vsub.f32 %v1110, %v1166
        %v1168 = vand.u32 %v1167, 4294901760
        %v1169 = vsub.f32 %v1167, %v1168
        %v1170 = vand.u32 %v1169, 4294901760
        %1171 = vmatpush.msra.mxu0 %v1170
        %v1172 = vand.u32 %v1109, 4294901760
        %v1173 = vsub.f32 %v1109, %v1172
        %v1174 = vand.u32 %v1173, 4294901760
        %v1175 = vsub.f32 %v1173, %v1174
        %v1176 = vand.u32 %v1175, 4294901760
        %1177 = vmatpush.msra.mxu0 %v1176
        %v1178 = vand.u32 %v1108, 4294901760
        %v1179 = vsub.f32 %v1108, %v1178
        %v1180 = vand.u32 %v1179, 4294901760
        %v1181 = vsub.f32 %v1179, %v1180
        %v1182 = vand.u32 %v1181, 4294901760
        %1183 = vmatpush.msra.mxu0 %v1182
        %v1184 = vand.u32 %v1107, 4294901760
        %v1185 = vsub.f32 %v1107, %v1184
        %v1186 = vand.u32 %v1185, 4294901760
        %v1187 = vsub.f32 %v1185, %v1186
        %v1188 = vand.u32 %v1187, 4294901760
        %1189 = vmatpush.msra.mxu0 %v1188
        %v1190 = vand.u32 %v1112, 4294901760
        %1191 = vmatmul.f32.gmra.mxu0 %v1190
        %v1192 = vpop.f32.mrf.mxu0
        %v1193 = vadd.f32 %v1144, %v1192
        %v1194 = vand.u32 %v1115, 4294901760
        %1195 = vmatmul.f32.gmra.mxu0 %v1194
        %v1196 = vpop.f32.mrf.mxu0
        %v1197 = vadd.f32 %v1152, %v1196
        %1198 = vdwg.mxu0
        %1199 = vmatpush.msra.mxu0 0.0
        %1200 = vmatpush.msra.mxu0 0.0
        %1201 = vmatpush.msra.mxu0 0.0
        %1202 = vmatpush.msra.mxu0 0.0
        %1203 = vmatpush.msra.mxu0 0.0
        %1204 = vmatpush.msra.mxu0 0.0
        %1205 = vmatpush.msra.mxu0 0.0
        %1206 = vmatpush.msra.mxu0 0.0
        %1207 = vmatpush.msra.mxu0 0.0
        %1208 = vmatpush.msra.mxu0 0.0
        %1209 = vmatpush.msra.mxu0 0.0
        %1210 = vmatpush.msra.mxu0 0.0
        %v1211 = vand.u32 %v1110, 4294901760
        %v1212 = vsub.f32 %v1110, %v1211
        %1213 = vmatpush.msra.mxu0 %v1212
        %v1214 = vand.u32 %v1109, 4294901760
        %v1215 = vsub.f32 %v1109, %v1214
        %1216 = vmatpush.msra.mxu0 %v1215
        %v1217 = vand.u32 %v1108, 4294901760
        %v1218 = vsub.f32 %v1108, %v1217
        %1219 = vmatpush.msra.mxu0 %v1218
        %v1220 = vand.u32 %v1107, 4294901760
        %v1221 = vsub.f32 %v1107, %v1220
        %1222 = vmatpush.msra.mxu0 %v1221
        %v1223 = vand.u32 %v1112, 4294901760
        %v1224 = vsub.f32 %v1112, %v1223
        %1225 = vmatmul.f32.gmra.mxu0 %v1224
        %v1226 = vpop.f32.mrf.mxu0
        %v1227 = vadd.f32 %v1193, %v1226
        %v1228 = vand.u32 %v1115, 4294901760
        %v1229 = vsub.f32 %v1115, %v1228
        %1230 = vmatmul.f32.gmra.mxu0 %v1229
        %v1231 = vpop.f32.mrf.mxu0
        %v1232 = vadd.f32 %v1197, %v1231
        %1233 = vdwg.mxu0
        %1234 = vmatpush.msra.mxu0 0.0
        %1235 = vmatpush.msra.mxu0 0.0
        %1236 = vmatpush.msra.mxu0 0.0
        %1237 = vmatpush.msra.mxu0 0.0
        %1238 = vmatpush.msra.mxu0 0.0
        %1239 = vmatpush.msra.mxu0 0.0
        %1240 = vmatpush.msra.mxu0 0.0
        %1241 = vmatpush.msra.mxu0 0.0
        %1242 = vmatpush.msra.mxu0 0.0
        %1243 = vmatpush.msra.mxu0 0.0
        %1244 = vmatpush.msra.mxu0 0.0
        %1245 = vmatpush.msra.mxu0 0.0
        %v1246 = vand.u32 %v1110, 4294901760
        %1247 = vmatpush.msra.mxu0 %v1246
        %v1248 = vand.u32 %v1109, 4294901760
        %1249 = vmatpush.msra.mxu0 %v1248
        %v1250 = vand.u32 %v1108, 4294901760
        %1251 = vmatpush.msra.mxu0 %v1250
        %v1252 = vand.u32 %v1107, 4294901760
        %1253 = vmatpush.msra.mxu0 %v1252
        %v1254 = vand.u32 %v1112, 4294901760
        %v1255 = vsub.f32 %v1112, %v1254
        %v1256 = vand.u32 %v1255, 4294901760
        %1257 = vmatmul.f32.gmra.mxu0 %v1256
        %v1258 = vpop.f32.mrf.mxu0
        %v1259 = vadd.f32 %v1227, %v1258
        %v1260 = vand.u32 %v1115, 4294901760
        %v1261 = vsub.f32 %v1115, %v1260
        %v1262 = vand.u32 %v1261, 4294901760
        %1263 = vmatmul.f32.gmra.mxu0 %v1262
        %v1264 = vpop.f32.mrf.mxu0
        %v1265 = vadd.f32 %v1232, %v1264
        %1266 = vdwg.mxu0
        %1267 = vmatpush.msra.mxu0 0.0
        %1268 = vmatpush.msra.mxu0 0.0
        %1269 = vmatpush.msra.mxu0 0.0
        %1270 = vmatpush.msra.mxu0 0.0
        %1271 = vmatpush.msra.mxu0 0.0
        %1272 = vmatpush.msra.mxu0 0.0
        %1273 = vmatpush.msra.mxu0 0.0
        %1274 = vmatpush.msra.mxu0 0.0
        %1275 = vmatpush.msra.mxu0 0.0
        %1276 = vmatpush.msra.mxu0 0.0
        %1277 = vmatpush.msra.mxu0 0.0
        %1278 = vmatpush.msra.mxu0 0.0
        %v1279 = vand.u32 %v1110, 4294901760
        %v1280 = vsub.f32 %v1110, %v1279
        %v1281 = vand.u32 %v1280, 4294901760
        %1282 = vmatpush.msra.mxu0 %v1281
        %v1283 = vand.u32 %v1109, 4294901760
        %v1284 = vsub.f32 %v1109, %v1283
        %v1285 = vand.u32 %v1284, 4294901760
        %1286 = vmatpush.msra.mxu0 %v1285
        %v1287 = vand.u32 %v1108, 4294901760
        %v1288 = vsub.f32 %v1108, %v1287
        %v1289 = vand.u32 %v1288, 4294901760
        %1290 = vmatpush.msra.mxu0 %v1289
        %v1291 = vand.u32 %v1107, 4294901760
        %v1292 = vsub.f32 %v1107, %v1291
        %v1293 = vand.u32 %v1292, 4294901760
        %1294 = vmatpush.msra.mxu0 %v1293
        %v1295 = vand.u32 %v1112, 4294901760
        %1296 = vmatmul.f32.gmra.mxu0 %v1295
        %v1297 = vpop.f32.mrf.mxu0
        %v1298 = vadd.f32 %v1259, %v1297
        %v1299 = vand.u32 %v1115, 4294901760
        %1300 = vmatmul.f32.gmra.mxu0 %v1299
        %v1301 = vpop.f32.mrf.mxu0
        %v1302 = vadd.f32 %v1265, %v1301
        %1303 = vdwg.mxu0
        %1304 = vmatpush.msra.mxu0 0.0
        %1305 = vmatpush.msra.mxu0 0.0
        %1306 = vmatpush.msra.mxu0 0.0
        %1307 = vmatpush.msra.mxu0 0.0
        %1308 = vmatpush.msra.mxu0 0.0
        %1309 = vmatpush.msra.mxu0 0.0
        %1310 = vmatpush.msra.mxu0 0.0
        %1311 = vmatpush.msra.mxu0 0.0
        %1312 = vmatpush.msra.mxu0 0.0
        %1313 = vmatpush.msra.mxu0 0.0
        %1314 = vmatpush.msra.mxu0 0.0
        %1315 = vmatpush.msra.mxu0 0.0
        %v1316 = vand.u32 %v1110, 4294901760
        %1317 = vmatpush.msra.mxu0 %v1316
        %v1318 = vand.u32 %v1109, 4294901760
        %1319 = vmatpush.msra.mxu0 %v1318
        %v1320 = vand.u32 %v1108, 4294901760
        %1321 = vmatpush.msra.mxu0 %v1320
        %v1322 = vand.u32 %v1107, 4294901760
        %1323 = vmatpush.msra.mxu0 %v1322
        %v1324 = vand.u32 %v1112, 4294901760
        %1325 = vmatmul.f32.gmra.mxu0 %v1324
        %v1326 = vpop.f32.mrf.mxu0
        %v1327 = vadd.f32 %v1298, %v1326
        %v1328 = vand.u32 %v1115, 4294901760
        %1329 = vmatmul.f32.gmra.mxu0 %v1328
        %v1330 = vpop.f32.mrf.mxu0
        %v1331 = vadd.f32 %v1302, %v1330
        %1332 = vdwg.mxu0
        %v1333 = vadd.f32 %v1102, %v1327
        %v1334 = vadd.f32 %v1103, %v1331
        %v1335 = vld [vmem:[#allocation2 + $0x5] sm:$0xff]
        %v1336 = vld [vmem:[#allocation2 + $0xd] sm:$0xff]
        %s1337 = scalar_lea.vmem %s1, 160
        %v1338 = vld [vmem:[%s1337] sm:$0xff]
        %v1339 = vld [vmem:[%s1337 + $0x8] sm:$0xff]
        %v1340 = vld [vmem:[%s1337 + $0x10] sm:$0xff]
        %v1341 = vld [vmem:[%s1337 + $0x18] sm:$0xff]
        %v1343 = vsel %vm167, %v1335, 0
        %v1346 = vsel %vm167, %v1336, 0
        %1348 = vmatpush.msra.mxu0 0.0
        %1349 = vmatpush.msra.mxu0 0.0
        %1350 = vmatpush.msra.mxu0 0.0
        %1351 = vmatpush.msra.mxu0 0.0
        %1352 = vmatpush.msra.mxu0 0.0
        %1353 = vmatpush.msra.mxu0 0.0
        %1354 = vmatpush.msra.mxu0 0.0
        %1355 = vmatpush.msra.mxu0 0.0
        %1356 = vmatpush.msra.mxu0 0.0
        %1357 = vmatpush.msra.mxu0 0.0
        %1358 = vmatpush.msra.mxu0 0.0
        %1359 = vmatpush.msra.mxu0 0.0
        %v1360 = vand.u32 %v1341, 4294901760
        %1361 = vmatpush.msra.mxu0 %v1360
        %v1362 = vand.u32 %v1340, 4294901760
        %1363 = vmatpush.msra.mxu0 %v1362
        %v1364 = vand.u32 %v1339, 4294901760
        %1365 = vmatpush.msra.mxu0 %v1364
        %v1366 = vand.u32 %v1338, 4294901760
        %1367 = vmatpush.msra.mxu0 %v1366
        %v1368 = vand.u32 %v1343, 4294901760
        %v1369 = vsub.f32 %v1343, %v1368
        %v1370 = vand.u32 %v1369, 4294901760
        %v1371 = vsub.f32 %v1369, %v1370
        %v1372 = vand.u32 %v1371, 4294901760
        %1373 = vmatmul.f32.gmra.mxu0 %v1372
        %v1374 = vpop.f32.mrf.mxu0
        %v1375 = vadd.f32 0.0, %v1374
        %v1376 = vand.u32 %v1346, 4294901760
        %v1377 = vsub.f32 %v1346, %v1376
        %v1378 = vand.u32 %v1377, 4294901760
        %v1379 = vsub.f32 %v1377, %v1378
        %v1380 = vand.u32 %v1379, 4294901760
        %1381 = vmatmul.f32.gmra.mxu0 %v1380
        %v1382 = vpop.f32.mrf.mxu0
        %v1383 = vadd.f32 0.0, %v1382
        %1384 = vdwg.mxu0
        %1385 = vmatpush.msra.mxu0 0.0
        %1386 = vmatpush.msra.mxu0 0.0
        %1387 = vmatpush.msra.mxu0 0.0
        %1388 = vmatpush.msra.mxu0 0.0
        %1389 = vmatpush.msra.mxu0 0.0
        %1390 = vmatpush.msra.mxu0 0.0
        %1391 = vmatpush.msra.mxu0 0.0
        %1392 = vmatpush.msra.mxu0 0.0
        %1393 = vmatpush.msra.mxu0 0.0
        %1394 = vmatpush.msra.mxu0 0.0
        %1395 = vmatpush.msra.mxu0 0.0
        %1396 = vmatpush.msra.mxu0 0.0
        %v1397 = vand.u32 %v1341, 4294901760
        %v1398 = vsub.f32 %v1341, %v1397
        %v1399 = vand.u32 %v1398, 4294901760
        %v1400 = vsub.f32 %v1398, %v1399
        %v1401 = vand.u32 %v1400, 4294901760
        %1402 = vmatpush.msra.mxu0 %v1401
        %v1403 = vand.u32 %v1340, 4294901760
        %v1404 = vsub.f32 %v1340, %v1403
        %v1405 = vand.u32 %v1404, 4294901760
        %v1406 = vsub.f32 %v1404, %v1405
        %v1407 = vand.u32 %v1406, 4294901760
        %1408 = vmatpush.msra.mxu0 %v1407
        %v1409 = vand.u32 %v1339, 4294901760
        %v1410 = vsub.f32 %v1339, %v1409
        %v1411 = vand.u32 %v1410, 4294901760
        %v1412 = vsub.f32 %v1410, %v1411
        %v1413 = vand.u32 %v1412, 4294901760
        %1414 = vmatpush.msra.mxu0 %v1413
        %v1415 = vand.u32 %v1338, 4294901760
        %v1416 = vsub.f32 %v1338, %v1415
        %v1417 = vand.u32 %v1416, 4294901760
        %v1418 = vsub.f32 %v1416, %v1417
        %v1419 = vand.u32 %v1418, 4294901760
        %1420 = vmatpush.msra.mxu0 %v1419
        %v1421 = vand.u32 %v1343, 4294901760
        %1422 = vmatmul.f32.gmra.mxu0 %v1421
        %v1423 = vpop.f32.mrf.mxu0
        %v1424 = vadd.f32 %v1375, %v1423
        %v1425 = vand.u32 %v1346, 4294901760
        %1426 = vmatmul.f32.gmra.mxu0 %v1425
        %v1427 = vpop.f32.mrf.mxu0
        %v1428 = vadd.f32 %v1383, %v1427
        %1429 = vdwg.mxu0
        %1430 = vmatpush.msra.mxu0 0.0
        %1431 = vmatpush.msra.mxu0 0.0
        %1432 = vmatpush.msra.mxu0 0.0
        %1433 = vmatpush.msra.mxu0 0.0
        %1434 = vmatpush.msra.mxu0 0.0
        %1435 = vmatpush.msra.mxu0 0.0
        %1436 = vmatpush.msra.mxu0 0.0
        %1437 = vmatpush.msra.mxu0 0.0
        %1438 = vmatpush.msra.mxu0 0.0
        %1439 = vmatpush.msra.mxu0 0.0
        %1440 = vmatpush.msra.mxu0 0.0
        %1441 = vmatpush.msra.mxu0 0.0
        %v1442 = vand.u32 %v1341, 4294901760
        %v1443 = vsub.f32 %v1341, %v1442
        %1444 = vmatpush.msra.mxu0 %v1443
        %v1445 = vand.u32 %v1340, 4294901760
        %v1446 = vsub.f32 %v1340, %v1445
        %1447 = vmatpush.msra.mxu0 %v1446
        %v1448 = vand.u32 %v1339, 4294901760
        %v1449 = vsub.f32 %v1339, %v1448
        %1450 = vmatpush.msra.mxu0 %v1449
        %v1451 = vand.u32 %v1338, 4294901760
        %v1452 = vsub.f32 %v1338, %v1451
        %1453 = vmatpush.msra.mxu0 %v1452
        %v1454 = vand.u32 %v1343, 4294901760
        %v1455 = vsub.f32 %v1343, %v1454
        %1456 = vmatmul.f32.gmra.mxu0 %v1455
        %v1457 = vpop.f32.mrf.mxu0
        %v1458 = vadd.f32 %v1424, %v1457
        %v1459 = vand.u32 %v1346, 4294901760
        %v1460 = vsub.f32 %v1346, %v1459
        %1461 = vmatmul.f32.gmra.mxu0 %v1460
        %v1462 = vpop.f32.mrf.mxu0
        %v1463 = vadd.f32 %v1428, %v1462
        %1464 = vdwg.mxu0
        %1465 = vmatpush.msra.mxu0 0.0
        %1466 = vmatpush.msra.mxu0 0.0
        %1467 = vmatpush.msra.mxu0 0.0
        %1468 = vmatpush.msra.mxu0 0.0
        %1469 = vmatpush.msra.mxu0 0.0
        %1470 = vmatpush.msra.mxu0 0.0
        %1471 = vmatpush.msra.mxu0 0.0
        %1472 = vmatpush.msra.mxu0 0.0
        %1473 = vmatpush.msra.mxu0 0.0
        %1474 = vmatpush.msra.mxu0 0.0
        %1475 = vmatpush.msra.mxu0 0.0
        %1476 = vmatpush.msra.mxu0 0.0
        %v1477 = vand.u32 %v1341, 4294901760
        %1478 = vmatpush.msra.mxu0 %v1477
        %v1479 = vand.u32 %v1340, 4294901760
        %1480 = vmatpush.msra.mxu0 %v1479
        %v1481 = vand.u32 %v1339, 4294901760
        %1482 = vmatpush.msra.mxu0 %v1481
        %v1483 = vand.u32 %v1338, 4294901760
        %1484 = vmatpush.msra.mxu0 %v1483
        %v1485 = vand.u32 %v1343, 4294901760
        %v1486 = vsub.f32 %v1343, %v1485
        %v1487 = vand.u32 %v1486, 4294901760
        %1488 = vmatmul.f32.gmra.mxu0 %v1487
        %v1489 = vpop.f32.mrf.mxu0
        %v1490 = vadd.f32 %v1458, %v1489
        %v1491 = vand.u32 %v1346, 4294901760
        %v1492 = vsub.f32 %v1346, %v1491
        %v1493 = vand.u32 %v1492, 4294901760
        %1494 = vmatmul.f32.gmra.mxu0 %v1493
        %v1495 = vpop.f32.mrf.mxu0
        %v1496 = vadd.f32 %v1463, %v1495
        %1497 = vdwg.mxu0
        %1498 = vmatpush.msra.mxu0 0.0
        %1499 = vmatpush.msra.mxu0 0.0
        %1500 = vmatpush.msra.mxu0 0.0
        %1501 = vmatpush.msra.mxu0 0.0
        %1502 = vmatpush.msra.mxu0 0.0
        %1503 = vmatpush.msra.mxu0 0.0
        %1504 = vmatpush.msra.mxu0 0.0
        %1505 = vmatpush.msra.mxu0 0.0
        %1506 = vmatpush.msra.mxu0 0.0
        %1507 = vmatpush.msra.mxu0 0.0
        %1508 = vmatpush.msra.mxu0 0.0
        %1509 = vmatpush.msra.mxu0 0.0
        %v1510 = vand.u32 %v1341, 4294901760
        %v1511 = vsub.f32 %v1341, %v1510
        %v1512 = vand.u32 %v1511, 4294901760
        %1513 = vmatpush.msra.mxu0 %v1512
        %v1514 = vand.u32 %v1340, 4294901760
        %v1515 = vsub.f32 %v1340, %v1514
        %v1516 = vand.u32 %v1515, 4294901760
        %1517 = vmatpush.msra.mxu0 %v1516
        %v1518 = vand.u32 %v1339, 4294901760
        %v1519 = vsub.f32 %v1339, %v1518
        %v1520 = vand.u32 %v1519, 4294901760
        %1521 = vmatpush.msra.mxu0 %v1520
        %v1522 = vand.u32 %v1338, 4294901760
        %v1523 = vsub.f32 %v1338, %v1522
        %v1524 = vand.u32 %v1523, 4294901760
        %1525 = vmatpush.msra.mxu0 %v1524
        %v1526 = vand.u32 %v1343, 4294901760
        %1527 = vmatmul.f32.gmra.mxu0 %v1526
        %v1528 = vpop.f32.mrf.mxu0
        %v1529 = vadd.f32 %v1490, %v1528
        %v1530 = vand.u32 %v1346, 4294901760
        %1531 = vmatmul.f32.gmra.mxu0 %v1530
        %v1532 = vpop.f32.mrf.mxu0
        %v1533 = vadd.f32 %v1496, %v1532
        %1534 = vdwg.mxu0
        %1535 = vmatpush.msra.mxu0 0.0
        %1536 = vmatpush.msra.mxu0 0.0
        %1537 = vmatpush.msra.mxu0 0.0
        %1538 = vmatpush.msra.mxu0 0.0
        %1539 = vmatpush.msra.mxu0 0.0
        %1540 = vmatpush.msra.mxu0 0.0
        %1541 = vmatpush.msra.mxu0 0.0
        %1542 = vmatpush.msra.mxu0 0.0
        %1543 = vmatpush.msra.mxu0 0.0
        %1544 = vmatpush.msra.mxu0 0.0
        %1545 = vmatpush.msra.mxu0 0.0
        %1546 = vmatpush.msra.mxu0 0.0
        %v1547 = vand.u32 %v1341, 4294901760
        %1548 = vmatpush.msra.mxu0 %v1547
        %v1549 = vand.u32 %v1340, 4294901760
        %1550 = vmatpush.msra.mxu0 %v1549
        %v1551 = vand.u32 %v1339, 4294901760
        %1552 = vmatpush.msra.mxu0 %v1551
        %v1553 = vand.u32 %v1338, 4294901760
        %1554 = vmatpush.msra.mxu0 %v1553
        %v1555 = vand.u32 %v1343, 4294901760
        %1556 = vmatmul.f32.gmra.mxu0 %v1555
        %v1557 = vpop.f32.mrf.mxu0
        %v1558 = vadd.f32 %v1529, %v1557
        %v1559 = vand.u32 %v1346, 4294901760
        %1560 = vmatmul.f32.gmra.mxu0 %v1559
        %v1561 = vpop.f32.mrf.mxu0
        %v1562 = vadd.f32 %v1533, %v1561
        %1563 = vdwg.mxu0
        %v1564 = vadd.f32 %v1333, %v1558
        %v1565 = vadd.f32 %v1334, %v1562
        %v1566 = vld [vmem:[#allocation2 + $0x6] sm:$0xff]
        %v1567 = vld [vmem:[#allocation2 + $0xe] sm:$0xff]
        %s1568 = scalar_lea.vmem %s1, 192
        %v1569 = vld [vmem:[%s1568] sm:$0xff]
        %v1570 = vld [vmem:[%s1568 + $0x8] sm:$0xff]
        %v1571 = vld [vmem:[%s1568 + $0x10] sm:$0xff]
        %v1572 = vld [vmem:[%s1568 + $0x18] sm:$0xff]
        %v1574 = vsel %vm167, %v1566, 0
        %v1577 = vsel %vm167, %v1567, 0
        %1579 = vmatpush.msra.mxu0 0.0
        %1580 = vmatpush.msra.mxu0 0.0
        %1581 = vmatpush.msra.mxu0 0.0
        %1582 = vmatpush.msra.mxu0 0.0
        %1583 = vmatpush.msra.mxu0 0.0
        %1584 = vmatpush.msra.mxu0 0.0
        %1585 = vmatpush.msra.mxu0 0.0
        %1586 = vmatpush.msra.mxu0 0.0
        %1587 = vmatpush.msra.mxu0 0.0
        %1588 = vmatpush.msra.mxu0 0.0
        %1589 = vmatpush.msra.mxu0 0.0
        %1590 = vmatpush.msra.mxu0 0.0
        %v1591 = vand.u32 %v1572, 4294901760
        %1592 = vmatpush.msra.mxu0 %v1591
        %v1593 = vand.u32 %v1571, 4294901760
        %1594 = vmatpush.msra.mxu0 %v1593
        %v1595 = vand.u32 %v1570, 4294901760
        %1596 = vmatpush.msra.mxu0 %v1595
        %v1597 = vand.u32 %v1569, 4294901760
        %1598 = vmatpush.msra.mxu0 %v1597
        %v1599 = vand.u32 %v1574, 4294901760
        %v1600 = vsub.f32 %v1574, %v1599
        %v1601 = vand.u32 %v1600, 4294901760
        %v1602 = vsub.f32 %v1600, %v1601
        %v1603 = vand.u32 %v1602, 4294901760
        %1604 = vmatmul.f32.gmra.mxu0 %v1603
        %v1605 = vpop.f32.mrf.mxu0
        %v1606 = vadd.f32 0.0, %v1605
        %v1607 = vand.u32 %v1577, 4294901760
        %v1608 = vsub.f32 %v1577, %v1607
        %v1609 = vand.u32 %v1608, 4294901760
        %v1610 = vsub.f32 %v1608, %v1609
        %v1611 = vand.u32 %v1610, 4294901760
        %1612 = vmatmul.f32.gmra.mxu0 %v1611
        %v1613 = vpop.f32.mrf.mxu0
        %v1614 = vadd.f32 0.0, %v1613
        %1615 = vdwg.mxu0
        %1616 = vmatpush.msra.mxu0 0.0
        %1617 = vmatpush.msra.mxu0 0.0
        %1618 = vmatpush.msra.mxu0 0.0
        %1619 = vmatpush.msra.mxu0 0.0
        %1620 = vmatpush.msra.mxu0 0.0
        %1621 = vmatpush.msra.mxu0 0.0
        %1622 = vmatpush.msra.mxu0 0.0
        %1623 = vmatpush.msra.mxu0 0.0
        %1624 = vmatpush.msra.mxu0 0.0
        %1625 = vmatpush.msra.mxu0 0.0
        %1626 = vmatpush.msra.mxu0 0.0
        %1627 = vmatpush.msra.mxu0 0.0
        %v1628 = vand.u32 %v1572, 4294901760
        %v1629 = vsub.f32 %v1572, %v1628
        %v1630 = vand.u32 %v1629, 4294901760
        %v1631 = vsub.f32 %v1629, %v1630
        %v1632 = vand.u32 %v1631, 4294901760
        %1633 = vmatpush.msra.mxu0 %v1632
        %v1634 = vand.u32 %v1571, 4294901760
        %v1635 = vsub.f32 %v1571, %v1634
        %v1636 = vand.u32 %v1635, 4294901760
        %v1637 = vsub.f32 %v1635, %v1636
        %v1638 = vand.u32 %v1637, 4294901760
        %1639 = vmatpush.msra.mxu0 %v1638
        %v1640 = vand.u32 %v1570, 4294901760
        %v1641 = vsub.f32 %v1570, %v1640
        %v1642 = vand.u32 %v1641, 4294901760
        %v1643 = vsub.f32 %v1641, %v1642
        %v1644 = vand.u32 %v1643, 4294901760
        %1645 = vmatpush.msra.mxu0 %v1644
        %v1646 = vand.u32 %v1569, 4294901760
        %v1647 = vsub.f32 %v1569, %v1646
        %v1648 = vand.u32 %v1647, 4294901760
        %v1649 = vsub.f32 %v1647, %v1648
        %v1650 = vand.u32 %v1649, 4294901760
        %1651 = vmatpush.msra.mxu0 %v1650
        %v1652 = vand.u32 %v1574, 4294901760
        %1653 = vmatmul.f32.gmra.mxu0 %v1652
        %v1654 = vpop.f32.mrf.mxu0
        %v1655 = vadd.f32 %v1606, %v1654
        %v1656 = vand.u32 %v1577, 4294901760
        %1657 = vmatmul.f32.gmra.mxu0 %v1656
        %v1658 = vpop.f32.mrf.mxu0
        %v1659 = vadd.f32 %v1614, %v1658
        %1660 = vdwg.mxu0
        %1661 = vmatpush.msra.mxu0 0.0
        %1662 = vmatpush.msra.mxu0 0.0
        %1663 = vmatpush.msra.mxu0 0.0
        %1664 = vmatpush.msra.mxu0 0.0
        %1665 = vmatpush.msra.mxu0 0.0
        %1666 = vmatpush.msra.mxu0 0.0
        %1667 = vmatpush.msra.mxu0 0.0
        %1668 = vmatpush.msra.mxu0 0.0
        %1669 = vmatpush.msra.mxu0 0.0
        %1670 = vmatpush.msra.mxu0 0.0
        %1671 = vmatpush.msra.mxu0 0.0
        %1672 = vmatpush.msra.mxu0 0.0
        %v1673 = vand.u32 %v1572, 4294901760
        %v1674 = vsub.f32 %v1572, %v1673
        %1675 = vmatpush.msra.mxu0 %v1674
        %v1676 = vand.u32 %v1571, 4294901760
        %v1677 = vsub.f32 %v1571, %v1676
        %1678 = vmatpush.msra.mxu0 %v1677
        %v1679 = vand.u32 %v1570, 4294901760
        %v1680 = vsub.f32 %v1570, %v1679
        %1681 = vmatpush.msra.mxu0 %v1680
        %v1682 = vand.u32 %v1569, 4294901760
        %v1683 = vsub.f32 %v1569, %v1682
        %1684 = vmatpush.msra.mxu0 %v1683
        %v1685 = vand.u32 %v1574, 4294901760
        %v1686 = vsub.f32 %v1574, %v1685
        %1687 = vmatmul.f32.gmra.mxu0 %v1686
        %v1688 = vpop.f32.mrf.mxu0
        %v1689 = vadd.f32 %v1655, %v1688
        %v1690 = vand.u32 %v1577, 4294901760
        %v1691 = vsub.f32 %v1577, %v1690
        %1692 = vmatmul.f32.gmra.mxu0 %v1691
        %v1693 = vpop.f32.mrf.mxu0
        %v1694 = vadd.f32 %v1659, %v1693
        %1695 = vdwg.mxu0
        %1696 = vmatpush.msra.mxu0 0.0
        %1697 = vmatpush.msra.mxu0 0.0
        %1698 = vmatpush.msra.mxu0 0.0
        %1699 = vmatpush.msra.mxu0 0.0
        %1700 = vmatpush.msra.mxu0 0.0
        %1701 = vmatpush.msra.mxu0 0.0
        %1702 = vmatpush.msra.mxu0 0.0
        %1703 = vmatpush.msra.mxu0 0.0
        %1704 = vmatpush.msra.mxu0 0.0
        %1705 = vmatpush.msra.mxu0 0.0
        %1706 = vmatpush.msra.mxu0 0.0
        %1707 = vmatpush.msra.mxu0 0.0
        %v1708 = vand.u32 %v1572, 4294901760
        %1709 = vmatpush.msra.mxu0 %v1708
        %v1710 = vand.u32 %v1571, 4294901760
        %1711 = vmatpush.msra.mxu0 %v1710
        %v1712 = vand.u32 %v1570, 4294901760
        %1713 = vmatpush.msra.mxu0 %v1712
        %v1714 = vand.u32 %v1569, 4294901760
        %1715 = vmatpush.msra.mxu0 %v1714
        %v1716 = vand.u32 %v1574, 4294901760
        %v1717 = vsub.f32 %v1574, %v1716
        %v1718 = vand.u32 %v1717, 4294901760
        %1719 = vmatmul.f32.gmra.mxu0 %v1718
        %v1720 = vpop.f32.mrf.mxu0
        %v1721 = vadd.f32 %v1689, %v1720
        %v1722 = vand.u32 %v1577, 4294901760
        %v1723 = vsub.f32 %v1577, %v1722
        %v1724 = vand.u32 %v1723, 4294901760
        %1725 = vmatmul.f32.gmra.mxu0 %v1724
        %v1726 = vpop.f32.mrf.mxu0
        %v1727 = vadd.f32 %v1694, %v1726
        %1728 = vdwg.mxu0
        %1729 = vmatpush.msra.mxu0 0.0
        %1730 = vmatpush.msra.mxu0 0.0
        %1731 = vmatpush.msra.mxu0 0.0
        %1732 = vmatpush.msra.mxu0 0.0
        %1733 = vmatpush.msra.mxu0 0.0
        %1734 = vmatpush.msra.mxu0 0.0
        %1735 = vmatpush.msra.mxu0 0.0
        %1736 = vmatpush.msra.mxu0 0.0
        %1737 = vmatpush.msra.mxu0 0.0
        %1738 = vmatpush.msra.mxu0 0.0
        %1739 = vmatpush.msra.mxu0 0.0
        %1740 = vmatpush.msra.mxu0 0.0
        %v1741 = vand.u32 %v1572, 4294901760
        %v1742 = vsub.f32 %v1572, %v1741
        %v1743 = vand.u32 %v1742, 4294901760
        %1744 = vmatpush.msra.mxu0 %v1743
        %v1745 = vand.u32 %v1571, 4294901760
        %v1746 = vsub.f32 %v1571, %v1745
        %v1747 = vand.u32 %v1746, 4294901760
        %1748 = vmatpush.msra.mxu0 %v1747
        %v1749 = vand.u32 %v1570, 4294901760
        %v1750 = vsub.f32 %v1570, %v1749
        %v1751 = vand.u32 %v1750, 4294901760
        %1752 = vmatpush.msra.mxu0 %v1751
        %v1753 = vand.u32 %v1569, 4294901760
        %v1754 = vsub.f32 %v1569, %v1753
        %v1755 = vand.u32 %v1754, 4294901760
        %1756 = vmatpush.msra.mxu0 %v1755
        %v1757 = vand.u32 %v1574, 4294901760
        %1758 = vmatmul.f32.gmra.mxu0 %v1757
        %v1759 = vpop.f32.mrf.mxu0
        %v1760 = vadd.f32 %v1721, %v1759
        %v1761 = vand.u32 %v1577, 4294901760
        %1762 = vmatmul.f32.gmra.mxu0 %v1761
        %v1763 = vpop.f32.mrf.mxu0
        %v1764 = vadd.f32 %v1727, %v1763
        %1765 = vdwg.mxu0
        %1766 = vmatpush.msra.mxu0 0.0
        %1767 = vmatpush.msra.mxu0 0.0
        %1768 = vmatpush.msra.mxu0 0.0
        %1769 = vmatpush.msra.mxu0 0.0
        %1770 = vmatpush.msra.mxu0 0.0
        %1771 = vmatpush.msra.mxu0 0.0
        %1772 = vmatpush.msra.mxu0 0.0
        %1773 = vmatpush.msra.mxu0 0.0
        %1774 = vmatpush.msra.mxu0 0.0
        %1775 = vmatpush.msra.mxu0 0.0
        %1776 = vmatpush.msra.mxu0 0.0
        %1777 = vmatpush.msra.mxu0 0.0
        %v1778 = vand.u32 %v1572, 4294901760
        %1779 = vmatpush.msra.mxu0 %v1778
        %v1780 = vand.u32 %v1571, 4294901760
        %1781 = vmatpush.msra.mxu0 %v1780
        %v1782 = vand.u32 %v1570, 4294901760
        %1783 = vmatpush.msra.mxu0 %v1782
        %v1784 = vand.u32 %v1569, 4294901760
        %1785 = vmatpush.msra.mxu0 %v1784
        %v1786 = vand.u32 %v1574, 4294901760
        %1787 = vmatmul.f32.gmra.mxu0 %v1786
        %v1788 = vpop.f32.mrf.mxu0
        %v1789 = vadd.f32 %v1760, %v1788
        %v1790 = vand.u32 %v1577, 4294901760
        %1791 = vmatmul.f32.gmra.mxu0 %v1790
        %v1792 = vpop.f32.mrf.mxu0
        %v1793 = vadd.f32 %v1764, %v1792
        %1794 = vdwg.mxu0
        %v1795 = vadd.f32 %v1564, %v1789
        %v1796 = vadd.f32 %v1565, %v1793
        %v1797 = vsub.f32 0.0, %v1795
        %v1798 = vsub.f32 0.0, %v1796
        %v1799 = vmul.f32 %v1797, 1.442695
        %v1800 = vpow.pop %v1799
        %v1801 = vmul.f32 %v1798, 1.442695
        %v1802 = vpow.pop %v1801
        %v1803 = vadd.f32 %v1800, 1.0
        %v1804 = vadd.f32 %v1802, 1.0
        %v1805 = vrcp.pop %v1803
        %v1806 = vmul.f32 %v1803, %v1805
        %v1807 = vsub.f32 1.0, %v1806
        %v1808 = vmul.f32 %v1805, %v1807
        %v1809 = vadd.f32 %v1805, %v1808
        %vm1810 = vweird.f32 %v1803
        %vm1811 = vweird.f32 %v1805
        %vm1812 = vmor %vm1810, %vm1811
        %v1813 = vsel %vm1812, %v1805, %v1809
        %v1814 = vand.u32 2147483647, %v1803
        %vm1815 = vcmp.eq.f32.partialorder %v1814, 8.507059e+37
        %v1816 = vand.u32 %v1803, 2147483648
        %v1817 = vor.u32 1.1754944e-38, %v1816
        %v1818 = vsel %vm1815, %v1817, %v1813
        %v1819 = vmul.f32 1.0, %v1818
        %v1820 = vrcp.pop %v1804
        %v1821 = vmul.f32 %v1804, %v1820
        %v1822 = vsub.f32 1.0, %v1821
        %v1823 = vmul.f32 %v1820, %v1822
        %v1824 = vadd.f32 %v1820, %v1823
        %vm1825 = vweird.f32 %v1804
        %vm1826 = vweird.f32 %v1820
        %vm1827 = vmor %vm1825, %vm1826
        %v1828 = vsel %vm1827, %v1820, %v1824
        %v1829 = vand.u32 2147483647, %v1804
        %vm1830 = vcmp.eq.f32.partialorder %v1829, 8.507059e+37
        %v1831 = vand.u32 %v1804, 2147483648
        %v1832 = vor.u32 1.1754944e-38, %v1831
        %v1833 = vsel %vm1830, %v1832, %v1828
        %v1834 = vmul.f32 1.0, %v1833
        %1835 = vst.msk [vmem:[%s136] sm:$0xff] %vm180, %v1819
        %1836 = vst.msk [vmem:[%s136 + $0x8] sm:$0xff] %vm180, %v1834
        %s1837 = sand.u32 %s71, 1
        %s1838 = scalar_lea.sflag [#allocation4], %s1837
        %s1839 = sand.u32 %s71, 1
        %s1840 = smul.addr %s1839, 16
        %s1841 = scalar_lea.vmem [#allocation3], %s1840
        // Predicated region
        $region29: #{spatial_attention_forward.1} parent=27 // pred_check
          %p1842 = pneg %p81
        $region30: #{spatial_attention_forward.1} parent=27 // pred_check_branch
          %1844 = sbr.rel (%p1842) target = $region32
        $region31: #{spatial_attention_forward.1} parent=27 // pred_region
          %1846 = vsyncadd %s1838, 0
          %s1847 = smul.addr %s16, 2
          %s1848 = smul.addr %s1847, 8
          %s1849 = scalar_lea.hbm %s2, %s1848
          %s1850 = sshll.u32 %s1841, 4
          %s1851 = int_to_ptr.vmem [resolvable:$true] %s1850
          %s1852 = sshll.u32 %s1849, 4
          %s1853 = int_to_ptr.hbm [resolvable:$true] %s1852
          %1858 = dma.vmem_to_hbm [thread:$0]  %s1851, 256, %s1853, %s1838, 128, 128, 8
        $region32: #{spatial_attention_forward.1} parent=27 // pred_fallthru
          _
      $region28: #{spatial_attention_forward.1} parent=5 // pred_fallthru
        _
      %p1859 = scmp.le.s32.totalorder 2, %s11
      // Predicated region
      $region33: #{spatial_attention_forward.1} parent=5 // pred_check
        %p1860 = pneg %p1859
      $region34: #{spatial_attention_forward.1} parent=5 // pred_check_branch
        %1862 = sbr.rel (%p1860) target = $region36
      $region35: #{spatial_attention_forward.1} parent=5 // pred_region
        %s1863 = ssub.s32 %s11, 2
        // Predicated region
        $region37: #{spatial_attention_forward.1} parent=35 // pred_check
          %p1864 = pneg %p87
        $region38: #{spatial_attention_forward.1} parent=35 // pred_check_branch
          %1866 = sbr.rel (%p1864) target = $region40
        $region39: #{spatial_attention_forward.1} parent=35 // pred_region
          %s1867 = sand.u32 %s72, 1
          %s1868 = scalar_lea.sflag [#allocation4], %s1867
          %s1869 = sand.u32 %s72, 1
          %s1870 = smul.addr %s1869, 16
          %s1871 = scalar_lea.vmem [#allocation3], %s1870
          %1873 = dma.done %s1868, 256
        $region40: #{spatial_attention_forward.1} parent=35 // pred_fallthru
          _
      $region36: #{spatial_attention_forward.1} parent=5 // pred_fallthru
        _
    $region6: #{spatial_attention_forward.1} parent=1 // loop_footer
      %s15 = sadd.s32 1, %s11
    $region7: #{spatial_attention_forward.1} parent=1 // loop_footer_branch
      %10 = sbr.rel target = $region3
    $region8: #{spatial_attention_forward.1} parent=1 // loop_exit
      _
    %1874 = vsyncpa [#allocation4], 1
    %s1875 = scalar_lea.sflag [#allocation4], 1
    %1876 = vsyncpa %s1875, 1

</llo_original>
